<compile_context>
chip_gen: v7x
topology: tpu7x:2x2x1
jax: 0.10.0
libtpu: 0.0.40
codegen_flags: <defaults>
</compile_context>

<pallas_src>
import jax
import jax.numpy as jnp
from jax.experimental import pallas as pl
from jax.experimental.pallas import tpu as pltpu


def _round_up(x, m):
    return (x + m - 1) // m * m


def _pick_row_tile(H, W, Cin, Coutp, budget_bytes=12 << 20):
    """Largest divisor TH of H whose double-buffered conv blocks fit the budget."""
    best = 1
    for th in range(1, H + 1):
        if H % th:
            continue
        if th != H and (th * W) % 8:
            continue  # keep the flat (TH*W, Cout_p) store sublane-aligned
        per_step = 4 * ((th + 2) * (W + 2) * Cin + th * W * Coutp + 8 * Coutp)
        if 2 * per_step <= budget_bytes:
            best = th
    return best


def _pick_bn_rows(rows, Coutp, budget_bytes=8 << 20):
    """Largest multiple-of-8 divisor of `rows` whose BN blocks fit the budget."""
    best = rows  # fallback: a single full block (always a legal block shape)
    for tr in range(8, min(rows, 32768) + 1, 8):
        if rows % tr:
            continue
        per_step = 2 * 4 * tr * Coutp  # input block + output block
        if 2 * per_step <= budget_bytes:
            best = tr
    return best


def conv_stats_kernel(xp_ref, w_ref, y_ref, stats_ref):
    # xp_ref   : (1, 1, TH+2, W+2, Cin)  padded input rows for this (batch, row-tile)
    # w_ref    : (9*Cin, Coutp)          folded 3x3 weights, Cout zero-padded to Coutp
    # y_ref    : (1, TH*W, Coutp)        flat, lane-dense conv output slab
    # stats_ref: (1, 1, 8, Coutp)        row 0 = per-tile sum, row 1 = per-tile
    #                                    centered sum of squares (M2); rows 2-7 zero
    TH = xp_ref.shape[2] - 2
    W = xp_ref.shape[3] - 2
    Cin = xp_ref.shape[4]
    Coutp = y_ref.shape[2]

    xp = xp_ref[0, 0]                                     # (TH+2, W+2, Cin)

    # im2col: fold all 9 taps and Cin into one contraction of size 9*Cin.
    cols = []
    for dh in range(3):
        for dw in range(3):
            cols.append(xp[dh:dh + TH, dw:dw + W, :].reshape(TH * W, Cin))
    patch = jnp.concatenate(cols, axis=-1)                # (TH*W, 9*Cin)

    acc = jnp.dot(patch, w_ref[...], preferred_element_type=jnp.float32)
    y_ref[0] = acc                                        # unmasked lane-dense store

    # Per-tile partial statistics (centered, for a numerically stable combine).
    n_t = TH * W
    psum = jnp.sum(acc, axis=0, keepdims=True)            # (1, Coutp)
    mean_t = psum / n_t
    pm2 = jnp.sum((acc - mean_t) ** 2, axis=0, keepdims=True)
    stats_ref[0, 0] = jnp.concatenate(
        [psum, pm2, jnp.zeros((6, Coutp), jnp.float32)], axis=0)


def bn_apply_kernel(y_ref, scale_ref, shift_ref, o_ref):
    # y_ref/o_ref: (TR, Coutp) ; scale/shift: (1, Coutp)
    o_ref[...] = y_ref[...] * scale_ref[...] + shift_ref[...]


def conv_bn_2d(x_nchw, w_oihw, gamma, beta, eps=1e-5):
    """ConvBn2d forward. x_nchw: (N, Cin, H, W) f32 -> (N, Cout, H, W) f32."""
    N, Cin, H, W = x_nchw.shape
    Cout = w_oihw.shape[0]
    Coutp = _round_up(Cout, 128)

    TH = _pick_row_tile(H, W, Cin, Coutp)
    T = H // TH

    # ---- layout prep (XLA fuses transpose + pad + window gather) ----
    # NCHW -> NHWC so channels sit on the TPU lane axis.
    x = jnp.transpose(x_nchw, (0, 2, 3, 1)).astype(jnp.float32)
    xp = jnp.pad(x, ((0, 0), (1, 1), (1, 1), (0, 0)))        # (N, H+2, W+2, Cin)
    # Per-row-tile windows with a 1-row halo on each side so the conv grid uses
    # plain Blocked BlockSpecs (no overlapping block indices).
    xt = jnp.stack([xp[:, t * TH:t * TH + TH + 2] for t in range(T)], axis=1)
    # xt: (N, T, TH+2, W+2, Cin)

    # OIHW -> (kh, kw, Cin, Cout) -> folded (9*Cin, Cout), Cout padded to Coutp.
    w = jnp.transpose(w_oihw, (2, 3, 1, 0)).astype(jnp.float32)
    w = w.reshape(9 * Cin, Cout)
    w = jnp.pad(w, ((0, 0), (0, Coutp - Cout)))

    # ---- pass 1: conv + per-tile partial BN statistics ----
    y, stats = pl.pallas_call(
        conv_stats_kernel,
        out_shape=(
            jax.ShapeDtypeStruct((N, H * W, Coutp), jnp.float32),
            jax.ShapeDtypeStruct((N, T, 8, Coutp), jnp.float32),
        ),
        grid_spec=pltpu.PrefetchScalarGridSpec(
            num_scalar_prefetch=0,
            grid=(N, T),
            in_specs=[
                pl.BlockSpec((1, 1, TH + 2, W + 2, Cin),
                             lambda n, t: (n, t, 0, 0, 0)),
                # Constant index_map: the pipeline fetches the weights once.
                pl.BlockSpec((9 * Cin, Coutp), lambda n, t: (0, 0)),
            ],
            out_specs=[
                pl.BlockSpec((1, TH * W, Coutp), lambda n, t: (n, t, 0)),
                pl.BlockSpec((1, 1, 8, Coutp), lambda n, t: (n, t, 0, 0)),
            ],
        ),
        compiler_params=pltpu.CompilerParams(
            dimension_semantics=("parallel", "parallel"),
            vmem_limit_bytes=32 * 1024 * 1024),
    )(xt, w)

    # ---- combine per-tile stats (tiny XLA reduction over (N*T, Coutp)) ----
    count = float(N * H * W)
    n_t = float(TH * W)
    sums = stats[:, :, 0, :]                                 # (N, T, Coutp)
    m2s = stats[:, :, 1, :]
    mean = jnp.sum(sums, axis=(0, 1)) / count
    mean_t = sums / n_t
    var = (jnp.sum(m2s, axis=(0, 1))
           + n_t * jnp.sum((mean_t - mean) ** 2, axis=(0, 1))) / count
    gamma_p = jnp.pad(gamma.astype(jnp.float32), (0, Coutp - Cout))
    beta_p = jnp.pad(beta.astype(jnp.float32), (0, Coutp - Cout))
    inv = jax.lax.rsqrt(var + eps)
    scale = (gamma_p * inv).reshape(1, Coutp)
    shift = (beta_p - mean * gamma_p * inv).reshape(1, Coutp)

    # ---- pass 2: apply BN over large lane-dense slabs ----
    rows = N * H * W
    TR = _pick_bn_rows(rows, Coutp)
    y_flat = y.reshape(rows, Coutp)

    out_flat = pl.pallas_call(
        bn_apply_kernel,
        out_shape=jax.ShapeDtypeStruct((rows, Coutp), jnp.float32),
        grid_spec=pltpu.PrefetchScalarGridSpec(
            num_scalar_prefetch=0,
            grid=(rows // TR,),
            in_specs=[
                pl.BlockSpec((TR, Coutp), lambda r: (r, 0)),
                pl.BlockSpec((1, Coutp), lambda r: (0, 0)),
                pl.BlockSpec((1, Coutp), lambda r: (0, 0)),
            ],
            out_specs=pl.BlockSpec((TR, Coutp), lambda r: (r, 0)),
        ),
        compiler_params=pltpu.CompilerParams(
            dimension_semantics=("parallel",),
            vmem_limit_bytes=32 * 1024 * 1024),
    )(y_flat, scale, shift)

    # (N*H*W, Coutp) -> NCHW, drop channel padding (XLA fuses slice+transpose).
    out = out_flat.reshape(N, H, W, Coutp)[:, :, :, :Cout]
    return jnp.transpose(out, (0, 3, 1, 2))


def _reference(x_nchw, w_oihw, gamma, beta, eps=1e-5):
    """Pure-JAX reference: conv2d (NCHW/OIHW) + training-mode batch norm."""
    y = jax.lax.conv_general_dilated(
        x_nchw, w_oihw, window_strides=(1, 1), padding=((1, 1), (1, 1)),
        dimension_numbers=("NCHW", "OIHW", "NCHW"))
    mean = jnp.mean(y, axis=(0, 2, 3), keepdims=True)
    var = jnp.mean((y - mean) ** 2, axis=(0, 2, 3), keepdims=True)
    g = gamma.reshape(1, -1, 1, 1)
    b = beta.reshape(1, -1, 1, 1)
    return (y - mean) * jax.lax.rsqrt(var + eps) * g + b


if __name__ == "__main__":
    N, Cin, Cout, H, W = 2, 4, 8, 16, 16

    key = jax.random.PRNGKey(0)
    kx, kw, kg, kb = jax.random.split(key, 4)

    x = jax.random.normal(kx, (N, Cin, H, W), dtype=jnp.float32)
    # Conv2d weight (out_channels, in_channels, kh, kw), bias=False
    w = jax.random.normal(kw, (Cout, Cin, 3, 3), dtype=jnp.float32) * 0.1
    # BatchNorm2d affine params
    gamma = 1.0 + 0.1 * jax.random.normal(kg, (Cout,), dtype=jnp.float32)
    beta = 0.1 * jax.random.normal(kb, (Cout,), dtype=jnp.float32)

    out = conv_bn_2d(x, w, gamma, beta)
    out = jax.block_until_ready(out)

    ref = _reference(x, w, gamma, beta)
    assert out.shape == (N, Cout, H, W)
    assert jnp.allclose(out, ref, rtol=1e-4, atol=1e-4), (
        float(jnp.max(jnp.abs(out - ref))))

    print("KERNEL_OK")
</pallas_src>

<mosaic_0001>
module attributes {stable_mosaic.version = 11 : i64} {
  func.func @conv_stats_kernel(%arg0: i32, %arg1: i32, %arg2: memref<1x1x18x18x4xf32, #tpu.memory_space<vmem>>, %arg3: memref<36x128xf32, #tpu.memory_space<vmem>>, %arg4: memref<1x256x128xf32, #tpu.memory_space<vmem>>, %arg5: memref<1x1x8x128xf32, #tpu.memory_space<vmem>>) attributes {dimension_semantics = [#tpu.dimension_semantics<parallel>, #tpu.dimension_semantics<parallel>], iteration_bounds = array<i64: 2, 1>, scalar_prefetch = 0 : i64, scratch_operands = 0 : i64, tpu.core_type = #tpu.core_type<tc>, window_params = [{transform_indices = @transform_0, window_bounds = array<i64: 1, 1, 18, 18, 4>}, {pipeline_mode = #tpu.pipeline_mode<synchronous>, transform_indices = @transform_1, window_bounds = array<i64: 36, 128>}, {transform_indices = @transform_2, window_bounds = array<i64: 1, 256, 128>}, {transform_indices = @transform_3, window_bounds = array<i64: 1, 1, 8, 128>}]} {
    %c0 = arith.constant 0 : index
    %c0_0 = arith.constant 0 : index
    %c0_1 = arith.constant 0 : index
    %c0_2 = arith.constant 0 : index
    %c0_3 = arith.constant 0 : index
    %0 = vector.load %arg2[%c0, %c0_0, %c0_1, %c0_2, %c0_3] : memref<1x1x18x18x4xf32, #tpu.memory_space<vmem>>, vector<1x1x18x18x4xf32>
    %1 = vector.shape_cast %0 : vector<1x1x18x18x4xf32> to vector<18x18x4xf32>
    %2 = vector.extract_strided_slice %1 {offsets = [0, 0, 0], sizes = [16, 16, 4], strides = [1, 1, 1]} : vector<18x18x4xf32> to vector<16x16x4xf32>
    %3 = vector.shape_cast %2 : vector<16x16x4xf32> to vector<256x4xf32>
    %4 = vector.extract_strided_slice %1 {offsets = [0, 1, 0], sizes = [16, 16, 4], strides = [1, 1, 1]} : vector<18x18x4xf32> to vector<16x16x4xf32>
    %5 = vector.shape_cast %4 : vector<16x16x4xf32> to vector<256x4xf32>
    %6 = vector.extract_strided_slice %1 {offsets = [0, 2, 0], sizes = [16, 16, 4], strides = [1, 1, 1]} : vector<18x18x4xf32> to vector<16x16x4xf32>
    %7 = vector.shape_cast %6 : vector<16x16x4xf32> to vector<256x4xf32>
    %8 = vector.extract_strided_slice %1 {offsets = [1, 0, 0], sizes = [16, 16, 4], strides = [1, 1, 1]} : vector<18x18x4xf32> to vector<16x16x4xf32>
    %9 = vector.shape_cast %8 : vector<16x16x4xf32> to vector<256x4xf32>
    %10 = vector.extract_strided_slice %1 {offsets = [1, 1, 0], sizes = [16, 16, 4], strides = [1, 1, 1]} : vector<18x18x4xf32> to vector<16x16x4xf32>
    %11 = vector.shape_cast %10 : vector<16x16x4xf32> to vector<256x4xf32>
    %12 = vector.extract_strided_slice %1 {offsets = [1, 2, 0], sizes = [16, 16, 4], strides = [1, 1, 1]} : vector<18x18x4xf32> to vector<16x16x4xf32>
    %13 = vector.shape_cast %12 : vector<16x16x4xf32> to vector<256x4xf32>
    %14 = vector.extract_strided_slice %1 {offsets = [2, 0, 0], sizes = [16, 16, 4], strides = [1, 1, 1]} : vector<18x18x4xf32> to vector<16x16x4xf32>
    %15 = vector.shape_cast %14 : vector<16x16x4xf32> to vector<256x4xf32>
    %16 = vector.extract_strided_slice %1 {offsets = [2, 1, 0], sizes = [16, 16, 4], strides = [1, 1, 1]} : vector<18x18x4xf32> to vector<16x16x4xf32>
    %17 = vector.shape_cast %16 : vector<16x16x4xf32> to vector<256x4xf32>
    %18 = vector.extract_strided_slice %1 {offsets = [2, 2, 0], sizes = [16, 16, 4], strides = [1, 1, 1]} : vector<18x18x4xf32> to vector<16x16x4xf32>
    %19 = vector.shape_cast %18 : vector<16x16x4xf32> to vector<256x4xf32>
    %20 = tpu.concatenate %3, %5, %7, %9, %11, %13, %15, %17, %19 in 1 : vector<256x4xf32>, vector<256x4xf32>, vector<256x4xf32>, vector<256x4xf32>, vector<256x4xf32>, vector<256x4xf32>, vector<256x4xf32>, vector<256x4xf32>, vector<256x4xf32> -> vector<256x36xf32>
    %c0_4 = arith.constant 0 : index
    %c0_5 = arith.constant 0 : index
    %21 = vector.load %arg3[%c0_4, %c0_5] : memref<36x128xf32, #tpu.memory_space<vmem>>, vector<36x128xf32>
    %cst = arith.constant dense<0.000000e+00> : vector<256x128xf32>
    %22 = tpu.matmul %20, %21, %cst {dimension_numbers = #tpu.dot_dimension_numbers<[1], [0], [0], [1], [0, 0, 1, 1], [], []>} : vector<256x36xf32>, vector<36x128xf32>, vector<256x128xf32> -> vector<256x128xf32>
    %c0_6 = arith.constant 0 : index
    %c0_7 = arith.constant 0 : index
    %c0_8 = arith.constant 0 : index
    %23 = vector.load %arg4[%c0_6, %c0_7, %c0_8] : memref<1x256x128xf32, #tpu.memory_space<vmem>>, vector<1x256x128xf32>
    %24 = vector.shape_cast %23 : vector<1x256x128xf32> to vector<256x128xf32>
    %25 = vector.shape_cast %22 : vector<256x128xf32> to vector<1x256x128xf32>
    tpu.vector_store %arg4[%c0_6, %c0_7, %c0_8], %25 {strides = array<i32>} : memref<1x256x128xf32, #tpu.memory_space<vmem>>, vector<1x256x128xf32>,
    %cst_9 = arith.constant dense<0.000000e+00> : vector<128xf32>
    %26 = vector.multi_reduction <add>, %22, %cst_9 [0] : vector<256x128xf32> to vector<128xf32>
    %27 = vector.shape_cast %26 : vector<128xf32> to vector<1x128xf32>
    %cst_10 = arith.constant 2.560000e+02 : f32
    %28 = vector.broadcast %cst_10 : f32 to vector<1x128xf32>
    %29 = arith.divf %27, %28 : vector<1x128xf32>
    %30 = vector.broadcast %29 : vector<1x128xf32> to vector<256x128xf32>
    %31 = arith.subf %22, %30 : vector<256x128xf32>
    %32 = arith.mulf %31, %31 : vector<256x128xf32>
    %cst_11 = arith.constant dense<0.000000e+00> : vector<128xf32>
    %33 = vector.multi_reduction <add>, %32, %cst_11 [0] : vector<256x128xf32> to vector<128xf32>
    %34 = vector.shape_cast %33 : vector<128xf32> to vector<1x128xf32>
    %cst_12 = arith.constant 0.000000e+00 : f32
    %35 = vector.broadcast %cst_12 : f32 to vector<6x128xf32>
    %36 = tpu.concatenate %27, %34, %35 in 0 : vector<1x128xf32>, vector<1x128xf32>, vector<6x128xf32> -> vector<8x128xf32>
    %c0_13 = arith.constant 0 : index
    %c0_14 = arith.constant 0 : index
    %c0_15 = arith.constant 0 : index
    %c0_16 = arith.constant 0 : index
    %37 = vector.load %arg5[%c0_13, %c0_14, %c0_15, %c0_16] : memref<1x1x8x128xf32, #tpu.memory_space<vmem>>, vector<1x1x8x128xf32>
    %38 = vector.shape_cast %37 : vector<1x1x8x128xf32> to vector<8x128xf32>
    %39 = vector.shape_cast %36 : vector<8x128xf32> to vector<1x1x8x128xf32>
    tpu.vector_store %arg5[%c0_13, %c0_14, %c0_15, %c0_16], %39 {strides = array<i32>} : memref<1x1x8x128xf32, #tpu.memory_space<vmem>>, vector<1x1x8x128xf32>,
    return
  }
  func.func @transform_0(%arg0: i32, %arg1: i32) -> (i32, i32, i32, i32, i32) {
    %c0_i32 = arith.constant 0 : i32
    %c0_i32_0 = arith.constant 0 : i32
    %c0_i32_1 = arith.constant 0 : i32
    %c0_i32_2 = arith.constant 0 : i32
    return %arg0, %arg1, %c0_i32, %c0_i32_0, %c0_i32_1 : i32, i32, i32, i32, i32
  }
  func.func @transform_1(%arg0: i32, %arg1: i32) -> (i32, i32) {
    %c0_i32 = arith.constant 0 : i32
    %c0_i32_0 = arith.constant 0 : i32
    %c0_i32_1 = arith.constant 0 : i32
    return %c0_i32, %c0_i32_0 : i32, i32
  }
  func.func @transform_2(%arg0: i32, %arg1: i32) -> (i32, i32, i32) {
    %c0_i32 = arith.constant 0 : i32
    %c0_i32_0 = arith.constant 0 : i32
    return %arg0, %arg1, %c0_i32 : i32, i32, i32
  }
  func.func @transform_3(%arg0: i32, %arg1: i32) -> (i32, i32, i32, i32) {
    %c0_i32 = arith.constant 0 : i32
    %c0_i32_0 = arith.constant 0 : i32
    %c0_i32_1 = arith.constant 0 : i32
    return %arg0, %arg1, %c0_i32, %c0_i32_0 : i32, i32, i32, i32
  }
}

</mosaic_0001>

<llo_original>
// kernel: tpu_custom_call.1
$region0: #{tpu_custom_call.1}
  #allocation0 [shape = 'u32[]', space=smem, size = 0x4, offset = 0x4, fixed_abs, tag = 'smem constant byte address 0x4 - core index']
  #allocation1 [shape = 'u32[144,128]{1,0:T(1,128)}', space=vmem, size = 0x12000, scoped, tag = 'internal scratch']
  %s0 = inlined_call_operand.vmem [shape: f32[2,1,18,18,4], index: 0, kind: input, shape index: {}]
  %s1 = inlined_call_operand.vmem [shape: f32[36,128], index: 1, kind: input, shape index: {}]
  %s2 = inlined_call_operand.hbm [shape: f32[2,256,128], index: 2, kind: output, shape index: {0}]
  %s3 = inlined_call_operand.hbm [shape: f32[2,1,8,128], index: 3, kind: output, shape index: {1}]
  %4 = xla_tuple %s2, %s3
  %s5 = sld [smem:[#allocation0]]
  $region49: #{tpu_custom_call.1} parent=0
    _
  %s7 = ssub.s32 1, %s5
  %s8 = scalar_select 0, %s7, %s5
  $region1: #{tpu_custom_call.1} parent=0
    #allocation2 [shape = 'u8[262144]{0}', space=vmem, size = 0x40000, scoped, tag = 'output window, operand 0']
    #allocation3 [shape = 's32[2]{0}', space=sflag, size = 0x8, scoped, tag = 'scoped memory for tpu_custom_call.1']
    #allocation4 [shape = 'u8[8192]{0}', space=vmem, size = 0x2000, scoped, tag = 'output window, operand 1']
    #allocation5 [shape = 's32[2]{0}', space=sflag, size = 0x8, scoped, tag = 'scoped memory for tpu_custom_call.1']
    %9 = vsyncpa [#allocation3], 0
    %s10 = scalar_lea.sflag [#allocation3], 1
    %11 = vsyncpa %s10, 0
    %12 = vsyncpa [#allocation5], 0
    %s13 = scalar_lea.sflag [#allocation5], 1
    %14 = vsyncpa %s13, 0
    loop: start=0, step=1, limit=4
    $region2: #{tpu_custom_call.1} parent=1 // loop_pre_header
      _
    $region3: #{tpu_custom_call.1} parent=1 // loop_header
      %s16 = sphi 0, %s20
      %p17 = scmp.ge.s32.totalorder %s16, 4
      %s23 = sphi 0, %s35
      %s24 = sphi 0, %s31
      %s25 = sphi 0, %s23
      %s26 = sphi 0, %s24
      %s27 = sphi 0, %s25
      %s28 = sphi 0, %s26
      %s40 = sphi 0, %s42
      %s43 = sphi 0, %s40
      %s44 = sphi 0, %s43
      %s60 = sphi 0, %s44
      %s64 = sphi 0, %s64
      %s66 = sphi 0, %s64
      %s67 = sphi 0, %s66
      %s81 = sphi 0, %s67
      %s89 = sphi 0, %s91
      %s92 = sphi 0, %s89
      %s93 = sphi 0, %s92
      %s109 = sphi 0, %s93
      %s117 = sphi 0, %s119
      %s120 = sphi 0, %s117
      %s121 = sphi 0, %s120
      %s137 = sphi 0, %s121
    $region4: #{tpu_custom_call.1} parent=1 // loop_header_branch
      %19 = sbr.rel (%p17) target = $region8
    $region5: #{tpu_custom_call.1} parent=1 // loop_body
      %s21 = ssub.s32 %s16, 1
      %s22 = ssub.s32 %s16, 2
      %s29 = sadd.s32 1, %s24
      %p30 = scmp.ge.s32.totalorder %s29, 1
      %s31 = scalar_select %p30, 0, %s29
      %s32 = sadd.s32 1, %s23
      %s33 = scalar_select %p30, %s32, %s23
      %p34 = scmp.ge.s32.totalorder %s33, 2
      %s35 = scalar_select %p34, 0, %s33
      %s36 = ssub.s32 %s23, %s35
      %s37 = ssub.s32 %s24, %s31
      %s38 = sor.u32 %s36, %s37
      %p39 = scmp.eq.s32.totalorder %s38, 0
      %s41 = sadd.s32 %s40, 1
      %s42 = scalar_select %p39, %s40, %s41
      %p45 = pneg %p39
      %p46 = scmp.eq.s32.totalorder %s16, 1
      %p47 = por %p45, %p46
      %p48 = scmp.ne.s32.totalorder %s40, %s43
      %p49 = scmp.eq.s32.totalorder %s16, 0
      %p50 = por %p48, %p49
      %p51 = scmp.ne.s32.totalorder %s40, %s43
      %p52 = scmp.eq.s32.totalorder %s21, 1
      %p53 = por %p51, %p52
      %p54 = scmp.ne.s32.totalorder %s43, %s44
      %p55 = scmp.eq.s32.totalorder %s21, 0
      %p56 = por %p54, %p55
      %p57 = scmp.ne.s32.totalorder %s43, %s44
      %p58 = scmp.eq.s32.totalorder %s22, 1
      %p59 = por %p57, %p58
      %p61 = scmp.ne.s32.totalorder %s44, %s60
      %p62 = scmp.eq.s32.totalorder %s22, 0
      %p63 = por %p61, %p62
      %s65 = sadd.s32 %s64, 1
      %p68 = scmp.eq.s32.totalorder %s16, 1
      %p69 = scmp.ne.s32.totalorder %s64, %s66
      %p70 = scmp.eq.s32.totalorder %s16, 0
      %p71 = por %p69, %p70
      %p72 = scmp.ne.s32.totalorder %s64, %s66
      %p73 = scmp.eq.s32.totalorder %s21, 1
      %p74 = por %p72, %p73
      %p75 = scmp.ne.s32.totalorder %s66, %s67
      %p76 = scmp.eq.s32.totalorder %s21, 0
      %p77 = por %p75, %p76
      %p78 = scmp.ne.s32.totalorder %s66, %s67
      %p79 = scmp.eq.s32.totalorder %s22, 1
      %p80 = por %p78, %p79
      %p82 = scmp.ne.s32.totalorder %s67, %s81
      %p83 = scmp.eq.s32.totalorder %s22, 0
      %p84 = por %p82, %p83
      %s85 = ssub.s32 %s23, %s35
      %s86 = ssub.s32 %s24, %s31
      %s87 = sor.u32 %s85, %s86
      %p88 = scmp.eq.s32.totalorder %s87, 0
      %s90 = sadd.s32 %s89, 1
      %s91 = scalar_select %p88, %s89, %s90
      %p94 = pneg %p88
      %p95 = scmp.eq.s32.totalorder %s16, 1
      %p96 = por %p94, %p95
      %p97 = scmp.ne.s32.totalorder %s89, %s92
      %p98 = scmp.eq.s32.totalorder %s16, 0
      %p99 = por %p97, %p98
      %p100 = scmp.ne.s32.totalorder %s89, %s92
      %p101 = scmp.eq.s32.totalorder %s21, 1
      %p102 = por %p100, %p101
      %p103 = scmp.ne.s32.totalorder %s92, %s93
      %p104 = scmp.eq.s32.totalorder %s21, 0
      %p105 = por %p103, %p104
      %p106 = scmp.ne.s32.totalorder %s92, %s93
      %p107 = scmp.eq.s32.totalorder %s22, 1
      %p108 = por %p106, %p107
      %p110 = scmp.ne.s32.totalorder %s93, %s109
      %p111 = scmp.eq.s32.totalorder %s22, 0
      %p112 = por %p110, %p111
      %s113 = ssub.s32 %s23, %s35
      %s114 = ssub.s32 %s24, %s31
      %s115 = sor.u32 %s113, %s114
      %p116 = scmp.eq.s32.totalorder %s115, 0
      %s118 = sadd.s32 %s117, 1
      %s119 = scalar_select %p116, %s117, %s118
      %p122 = pneg %p116
      %p123 = scmp.eq.s32.totalorder %s16, 1
      %p124 = por %p122, %p123
      %p125 = scmp.ne.s32.totalorder %s117, %s120
      %p126 = scmp.eq.s32.totalorder %s16, 0
      %p127 = por %p125, %p126
      %p128 = scmp.ne.s32.totalorder %s117, %s120
      %p129 = scmp.eq.s32.totalorder %s21, 1
      %p130 = por %p128, %p129
      %p131 = scmp.ne.s32.totalorder %s120, %s121
      %p132 = scmp.eq.s32.totalorder %s21, 0
      %p133 = por %p131, %p132
      %p134 = scmp.ne.s32.totalorder %s120, %s121
      %p135 = scmp.eq.s32.totalorder %s22, 1
      %p136 = por %p134, %p135
      %p138 = scmp.ne.s32.totalorder %s121, %s137
      %p139 = scmp.eq.s32.totalorder %s22, 0
      %p140 = por %p138, %p139
      %p141 = scmp.le.s32.totalorder 1, %s16
      %p142 = scmp.lt.s32.totalorder %s16, 3
      %p143 = pnand %p141, %p142
      %p144 = pneg %p143
      // Predicated region
      $region9: #{tpu_custom_call.1} parent=5 // pred_check
        _
      $region10: #{tpu_custom_call.1} parent=5 // pred_check_branch
        %146 = sbr.rel (%p143) target = $region12
      $region11: #{tpu_custom_call.1} parent=5 // pred_region
        %s147 = ssub.s32 %s16, 1
        // Predicated region
        $region13: #{tpu_custom_call.1} parent=11 // pred_check
          %p148 = pneg %p77
        $region14: #{tpu_custom_call.1} parent=11 // pred_check_branch
          %150 = sbr.rel (%p148) target = $region16
        $region15: #{tpu_custom_call.1} parent=11 // pred_region
          _
        $region16: #{tpu_custom_call.1} parent=11 // pred_fallthru
          _
      $region12: #{tpu_custom_call.1} parent=5 // pred_fallthru
        _
      %p151 = scmp.lt.s32.totalorder %s16, 2
      // Predicated region
      $region17: #{tpu_custom_call.1} parent=5 // pred_check
        %p152 = pneg %p151
      $region18: #{tpu_custom_call.1} parent=5 // pred_check_branch
        %154 = sbr.rel (%p152) target = $region20
      $region19: #{tpu_custom_call.1} parent=5 // pred_region
        // Predicated region
        $region21: #{tpu_custom_call.1} parent=19 // pred_check
          %p155 = pneg %p50
        $region22: #{tpu_custom_call.1} parent=19 // pred_check_branch
          %157 = sbr.rel (%p155) target = $region24
        $region23: #{tpu_custom_call.1} parent=19 // pred_region
          %p158 = scmp.lt.s32.totalorder %s23, 1
          %s159 = scalar_select %p158, %s23, 1
          %p160 = scmp.lt.s32.totalorder %s24, 0
          %s161 = scalar_select %p160, %s24, 0
          %s162 = smul.addr %s161, 54
          %s163 = smul.addr %s159, 54
          %s164 = sadd.s32 %s162, %s163
          %s165 = smul.addr %s164, 8
          %s166 = scalar_lea.vmem %s0, %s165
        $region24: #{tpu_custom_call.1} parent=19 // pred_fallthru
          _
      $region20: #{tpu_custom_call.1} parent=5 // pred_fallthru
        _
      %p167 = scmp.le.s32.totalorder 1, %s16
      %p168 = scmp.lt.s32.totalorder %s16, 3
      %p169 = pnand %p167, %p168
      %p170 = pneg %p169
      // Predicated region
      $region25: #{tpu_custom_call.1} parent=5 // pred_check
        _
      $region26: #{tpu_custom_call.1} parent=5 // pred_check_branch
        %172 = sbr.rel (%p169) target = $region28
      $region27: #{tpu_custom_call.1} parent=5 // pred_region
        %s173 = ssub.s32 %s16, 1
        %p174 = scmp.lt.s32.totalorder %s25, 1
        %s175 = scalar_select %p174, %s25, 1
        %p176 = scmp.lt.s32.totalorder %s26, 0
        %s177 = scalar_select %p176, %s26, 0
        %s178 = smul.addr %s177, 54
        %s179 = smul.addr %s175, 54
        %s180 = sadd.s32 %s178, %s179
        %s181 = smul.addr %s180, 8
        %s182 = scalar_lea.vmem %s0, %s181
        %p183 = pneg %p56
        %p184 = pneg %p53
        %p185 = pneg %p77
        %p186 = pneg %p74
        %p187 = pneg %p105
        %p188 = pneg %p102
        %s189 = sand.u32 %s92, 1
        %s190 = scalar_lea.sflag [#allocation3], %s189
        %s191 = sand.u32 %s92, 1
        %s192 = smul.addr %s191, 256
        %s193 = scalar_lea.vmem [#allocation2], %s192
        %p194 = pneg %p133
        %p195 = pneg %p130
        %s196 = sand.u32 %s120, 1
        %s197 = scalar_lea.sflag [#allocation5], %s196
        %s198 = sand.u32 %s120, 1
        %s199 = smul.addr %s198, 8
        %s200 = scalar_lea.vmem [#allocation4], %s199
        %p201 = scmp.lt.s32.totalorder %s25, 1
        %s202 = scalar_select %p201, %s25, 1
        %p203 = scmp.lt.s32.totalorder %s26, 0
        %s204 = scalar_select %p203, %s26, 0
        %s205 = smul.addr %s204, 54
        %s206 = smul.addr %s202, 54
        %s207 = sadd.s32 %s205, %s206
        %s208 = smul.addr %s207, 8
        %s209 = scalar_lea.vmem %s0, %s208
        %s210 = smul.u32 32, %s26
        %v211 = vld [vmem:[%s209] sm:$0xff]
        %v212 = vld [vmem:[%s209 + $0x8] sm:$0xff]
        %v213 = vld [vmem:[%s209 + $0x10] sm:$0x3]
        %v214 = vld [vmem:[%s209 + $0x18] sm:$0xff]
        %v215 = vld [vmem:[%s209 + $0x20] sm:$0xff]
        %v216 = vld [vmem:[%s209 + $0x28] sm:$0x3]
        %v217 = vld [vmem:[%s209 + $0x30] sm:$0xff]
        %v218 = vld [vmem:[%s209 + $0x38] sm:$0xff]
        %v219 = vld [vmem:[%s209 + $0x40] sm:$0x3]
        %v220 = vld [vmem:[%s209 + $0x48] sm:$0xff]
        %v221 = vld [vmem:[%s209 + $0x50] sm:$0xff]
        %v222 = vld [vmem:[%s209 + $0x58] sm:$0x3]
        %v223 = vld [vmem:[%s209 + $0x60] sm:$0xff]
        %v224 = vld [vmem:[%s209 + $0x68] sm:$0xff]
        %v225 = vld [vmem:[%s209 + $0x70] sm:$0x3]
        %v226 = vld [vmem:[%s209 + $0x78] sm:$0xff]
        %v227 = vld [vmem:[%s209 + $0x80] sm:$0xff]
        %v228 = vld [vmem:[%s209 + $0x88] sm:$0x3]
        %v229 = vld [vmem:[%s209 + $0x90] sm:$0xff]
        %v230 = vld [vmem:[%s209 + $0x98] sm:$0xff]
        %v231 = vld [vmem:[%s209 + $0xa0] sm:$0x3]
        %v232 = vld [vmem:[%s209 + $0xa8] sm:$0xff]
        %v233 = vld [vmem:[%s209 + $0xb0] sm:$0xff]
        %v234 = vld [vmem:[%s209 + $0xb8] sm:$0x3]
        %v235 = vld [vmem:[%s209 + $0xc0] sm:$0xff]
        %v236 = vld [vmem:[%s209 + $0xc8] sm:$0xff]
        %v237 = vld [vmem:[%s209 + $0xd0] sm:$0x3]
        %v238 = vld [vmem:[%s209 + $0xd8] sm:$0xff]
        %v239 = vld [vmem:[%s209 + $0xe0] sm:$0xff]
        %v240 = vld [vmem:[%s209 + $0xe8] sm:$0x3]
        %v241 = vld [vmem:[%s209 + $0xf0] sm:$0xff]
        %v242 = vld [vmem:[%s209 + $0xf8] sm:$0xff]
        %v243 = vld [vmem:[%s209 + $0x100] sm:$0x3]
        %v244 = vld [vmem:[%s209 + $0x108] sm:$0xff]
        %v245 = vld [vmem:[%s209 + $0x110] sm:$0xff]
        %v246 = vld [vmem:[%s209 + $0x118] sm:$0x3]
        %v247 = vld [vmem:[%s209 + $0x120] sm:$0xff]
        %v248 = vld [vmem:[%s209 + $0x128] sm:$0xff]
        %v249 = vld [vmem:[%s209 + $0x130] sm:$0x3]
        %v250 = vld [vmem:[%s209 + $0x138] sm:$0xff]
        %v251 = vld [vmem:[%s209 + $0x140] sm:$0xff]
        %v252 = vld [vmem:[%s209 + $0x148] sm:$0x3]
        %v253 = vld [vmem:[%s209 + $0x150] sm:$0xff]
        %v254 = vld [vmem:[%s209 + $0x158] sm:$0xff]
        %v255 = vld [vmem:[%s209 + $0x160] sm:$0x3]
        %v256 = vld [vmem:[%s209 + $0x168] sm:$0xff]
        %v257 = vld [vmem:[%s209 + $0x170] sm:$0xff]
        %v258 = vld [vmem:[%s209 + $0x178] sm:$0x3]
        %v259 = vld [vmem:[%s209 + $0x180] sm:$0xff]
        %v260 = vld [vmem:[%s209 + $0x188] sm:$0xff]
        %v261 = vld [vmem:[%s209 + $0x190] sm:$0x3]
        %v262 = vld [vmem:[%s209 + $0x198] sm:$0xff]
        %v263 = vld [vmem:[%s209 + $0x1a0] sm:$0xff]
        %v264 = vld [vmem:[%s209 + $0x1a8] sm:$0x3]
        %vm313 = vcmask 1046528
        %v314 = vrot.slane %v211, 1
        %v315 = vrot.slane %v212, 1
        %v316 = vsel %vm313, %v314, %v315
        %v317 = vrot.slane %v213, 1
        %v318 = vsel %vm313, %v315, %v317
        %v319 = vrot.slane %v214, 1
        %v320 = vrot.slane %v215, 1
        %v321 = vsel %vm313, %v319, %v320
        %v322 = vrot.slane %v216, 1
        %v323 = vsel %vm313, %v320, %v322
        %v324 = vrot.slane %v217, 1
        %v325 = vrot.slane %v218, 1
        %v326 = vsel %vm313, %v324, %v325
        %v327 = vrot.slane %v219, 1
        %v328 = vsel %vm313, %v325, %v327
        %v329 = vrot.slane %v220, 1
        %v330 = vrot.slane %v221, 1
        %v331 = vsel %vm313, %v329, %v330
        %v332 = vrot.slane %v222, 1
        %v333 = vsel %vm313, %v330, %v332
        %v334 = vrot.slane %v223, 1
        %v335 = vrot.slane %v224, 1
        %v336 = vsel %vm313, %v334, %v335
        %v337 = vrot.slane %v225, 1
        %v338 = vsel %vm313, %v335, %v337
        %v339 = vrot.slane %v226, 1
        %v340 = vrot.slane %v227, 1
        %v341 = vsel %vm313, %v339, %v340
        %v342 = vrot.slane %v228, 1
        %v343 = vsel %vm313, %v340, %v342
        %v344 = vrot.slane %v229, 1
        %v345 = vrot.slane %v230, 1
        %v346 = vsel %vm313, %v344, %v345
        %v347 = vrot.slane %v231, 1
        %v348 = vsel %vm313, %v345, %v347
        %v349 = vrot.slane %v232, 1
        %v350 = vrot.slane %v233, 1
        %v351 = vsel %vm313, %v349, %v350
        %v352 = vrot.slane %v234, 1
        %v353 = vsel %vm313, %v350, %v352
        %v354 = vrot.slane %v235, 1
        %v355 = vrot.slane %v236, 1
        %v356 = vsel %vm313, %v354, %v355
        %v357 = vrot.slane %v237, 1
        %v358 = vsel %vm313, %v355, %v357
        %v359 = vrot.slane %v238, 1
        %v360 = vrot.slane %v239, 1
        %v361 = vsel %vm313, %v359, %v360
        %v362 = vrot.slane %v240, 1
        %v363 = vsel %vm313, %v360, %v362
        %v364 = vrot.slane %v241, 1
        %v365 = vrot.slane %v242, 1
        %v366 = vsel %vm313, %v364, %v365
        %v367 = vrot.slane %v243, 1
        %v368 = vsel %vm313, %v365, %v367
        %v369 = vrot.slane %v244, 1
        %v370 = vrot.slane %v245, 1
        %v371 = vsel %vm313, %v369, %v370
        %v372 = vrot.slane %v246, 1
        %v373 = vsel %vm313, %v370, %v372
        %v374 = vrot.slane %v247, 1
        %v375 = vrot.slane %v248, 1
        %v376 = vsel %vm313, %v374, %v375
        %v377 = vrot.slane %v249, 1
        %v378 = vsel %vm313, %v375, %v377
        %v379 = vrot.slane %v250, 1
        %v380 = vrot.slane %v251, 1
        %v381 = vsel %vm313, %v379, %v380
        %v382 = vrot.slane %v252, 1
        %v383 = vsel %vm313, %v380, %v382
        %v384 = vrot.slane %v253, 1
        %v385 = vrot.slane %v254, 1
        %v386 = vsel %vm313, %v384, %v385
        %v387 = vrot.slane %v255, 1
        %v388 = vsel %vm313, %v385, %v387
        %v389 = vrot.slane %v256, 1
        %v390 = vrot.slane %v257, 1
        %v391 = vsel %vm313, %v389, %v390
        %v392 = vrot.slane %v258, 1
        %v393 = vsel %vm313, %v390, %v392
        %vm394 = vcmask 1045504
        %v395 = vrot.slane %v211, 2
        %v396 = vrot.slane %v212, 2
        %v397 = vsel %vm394, %v395, %v396
        %v398 = vrot.slane %v213, 2
        %v399 = vsel %vm394, %v396, %v398
        %v400 = vrot.slane %v214, 2
        %v401 = vrot.slane %v215, 2
        %v402 = vsel %vm394, %v400, %v401
        %v403 = vrot.slane %v216, 2
        %v404 = vsel %vm394, %v401, %v403
        %v405 = vrot.slane %v217, 2
        %v406 = vrot.slane %v218, 2
        %v407 = vsel %vm394, %v405, %v406
        %v408 = vrot.slane %v219, 2
        %v409 = vsel %vm394, %v406, %v408
        %v410 = vrot.slane %v220, 2
        %v411 = vrot.slane %v221, 2
        %v412 = vsel %vm394, %v410, %v411
        %v413 = vrot.slane %v222, 2
        %v414 = vsel %vm394, %v411, %v413
        %v415 = vrot.slane %v223, 2
        %v416 = vrot.slane %v224, 2
        %v417 = vsel %vm394, %v415, %v416
        %v418 = vrot.slane %v225, 2
        %v419 = vsel %vm394, %v416, %v418
        %v420 = vrot.slane %v226, 2
        %v421 = vrot.slane %v227, 2
        %v422 = vsel %vm394, %v420, %v421
        %v423 = vrot.slane %v228, 2
        %v424 = vsel %vm394, %v421, %v423
        %v425 = vrot.slane %v229, 2
        %v426 = vrot.slane %v230, 2
        %v427 = vsel %vm394, %v425, %v426
        %v428 = vrot.slane %v231, 2
        %v429 = vsel %vm394, %v426, %v428
        %v430 = vrot.slane %v232, 2
        %v431 = vrot.slane %v233, 2
        %v432 = vsel %vm394, %v430, %v431
        %v433 = vrot.slane %v234, 2
        %v434 = vsel %vm394, %v431, %v433
        %v435 = vrot.slane %v235, 2
        %v436 = vrot.slane %v236, 2
        %v437 = vsel %vm394, %v435, %v436
        %v438 = vrot.slane %v237, 2
        %v439 = vsel %vm394, %v436, %v438
        %v440 = vrot.slane %v238, 2
        %v441 = vrot.slane %v239, 2
        %v442 = vsel %vm394, %v440, %v441
        %v443 = vrot.slane %v240, 2
        %v444 = vsel %vm394, %v441, %v443
        %v445 = vrot.slane %v241, 2
        %v446 = vrot.slane %v242, 2
        %v447 = vsel %vm394, %v445, %v446
        %v448 = vrot.slane %v243, 2
        %v449 = vsel %vm394, %v446, %v448
        %v450 = vrot.slane %v244, 2
        %v451 = vrot.slane %v245, 2
        %v452 = vsel %vm394, %v450, %v451
        %v453 = vrot.slane %v246, 2
        %v454 = vsel %vm394, %v451, %v453
        %v455 = vrot.slane %v247, 2
        %v456 = vrot.slane %v248, 2
        %v457 = vsel %vm394, %v455, %v456
        %v458 = vrot.slane %v249, 2
        %v459 = vsel %vm394, %v456, %v458
        %v460 = vrot.slane %v250, 2
        %v461 = vrot.slane %v251, 2
        %v462 = vsel %vm394, %v460, %v461
        %v463 = vrot.slane %v252, 2
        %v464 = vsel %vm394, %v461, %v463
        %v465 = vrot.slane %v253, 2
        %v466 = vrot.slane %v254, 2
        %v467 = vsel %vm394, %v465, %v466
        %v468 = vrot.slane %v255, 2
        %v469 = vsel %vm394, %v466, %v468
        %v470 = vrot.slane %v256, 2
        %v471 = vrot.slane %v257, 2
        %v472 = vsel %vm394, %v470, %v471
        %v473 = vrot.slane %v258, 2
        %v474 = vsel %vm394, %v471, %v473
        %v478 = vrot.slane %v259, 1
        %v479 = vrot.slane %v260, 1
        %v480 = vsel %vm313, %v478, %v479
        %v481 = vrot.slane %v261, 1
        %v482 = vsel %vm313, %v479, %v481
        %v483 = vrot.slane %v259, 2
        %v484 = vrot.slane %v260, 2
        %v485 = vsel %vm394, %v483, %v484
        %v486 = vrot.slane %v261, 2
        %v487 = vsel %vm394, %v484, %v486
        %v491 = vrot.slane %v262, 1
        %v492 = vrot.slane %v263, 1
        %v493 = vsel %vm313, %v491, %v492
        %v494 = vrot.slane %v264, 1
        %v495 = vsel %vm313, %v492, %v494
        %v496 = vrot.slane %v262, 2
        %v497 = vrot.slane %v263, 2
        %v498 = vsel %vm394, %v496, %v497
        %v499 = vrot.slane %v264, 2
        %v500 = vsel %vm394, %v497, %v499
        %501 = vrot.lane.b32.xlu0 %v316, 4
        %v502 = vpop.permute.xlu0 %501
        %503 = vrot.lane.b32.xlu0 %v318, 4
        %v504 = vpop.permute.xlu0 %503
        %505 = vrot.lane.b32.xlu0 %v321, 4
        %v506 = vpop.permute.xlu0 %505
        %507 = vrot.lane.b32.xlu0 %v323, 4
        %v508 = vpop.permute.xlu0 %507
        %509 = vrot.lane.b32.xlu0 %v326, 4
        %v510 = vpop.permute.xlu0 %509
        %511 = vrot.lane.b32.xlu0 %v328, 4
        %v512 = vpop.permute.xlu0 %511
        %513 = vrot.lane.b32.xlu0 %v331, 4
        %v514 = vpop.permute.xlu0 %513
        %515 = vrot.lane.b32.xlu0 %v333, 4
        %v516 = vpop.permute.xlu0 %515
        %517 = vrot.lane.b32.xlu0 %v336, 4
        %v518 = vpop.permute.xlu0 %517
        %519 = vrot.lane.b32.xlu0 %v338, 4
        %v520 = vpop.permute.xlu0 %519
        %521 = vrot.lane.b32.xlu0 %v341, 4
        %v522 = vpop.permute.xlu0 %521
        %523 = vrot.lane.b32.xlu0 %v343, 4
        %v524 = vpop.permute.xlu0 %523
        %525 = vrot.lane.b32.xlu0 %v346, 4
        %v526 = vpop.permute.xlu0 %525
        %527 = vrot.lane.b32.xlu0 %v348, 4
        %v528 = vpop.permute.xlu0 %527
        %529 = vrot.lane.b32.xlu0 %v351, 4
        %v530 = vpop.permute.xlu0 %529
        %531 = vrot.lane.b32.xlu0 %v353, 4
        %v532 = vpop.permute.xlu0 %531
        %533 = vrot.lane.b32.xlu0 %v356, 4
        %v534 = vpop.permute.xlu0 %533
        %535 = vrot.lane.b32.xlu0 %v358, 4
        %v536 = vpop.permute.xlu0 %535
        %537 = vrot.lane.b32.xlu0 %v361, 4
        %v538 = vpop.permute.xlu0 %537
        %539 = vrot.lane.b32.xlu0 %v363, 4
        %v540 = vpop.permute.xlu0 %539
        %541 = vrot.lane.b32.xlu0 %v366, 4
        %v542 = vpop.permute.xlu0 %541
        %543 = vrot.lane.b32.xlu0 %v368, 4
        %v544 = vpop.permute.xlu0 %543
        %545 = vrot.lane.b32.xlu0 %v371, 4
        %v546 = vpop.permute.xlu0 %545
        %547 = vrot.lane.b32.xlu0 %v373, 4
        %v548 = vpop.permute.xlu0 %547
        %549 = vrot.lane.b32.xlu0 %v376, 4
        %v550 = vpop.permute.xlu0 %549
        %551 = vrot.lane.b32.xlu0 %v378, 4
        %v552 = vpop.permute.xlu0 %551
        %553 = vrot.lane.b32.xlu0 %v381, 4
        %v554 = vpop.permute.xlu0 %553
        %555 = vrot.lane.b32.xlu0 %v383, 4
        %v556 = vpop.permute.xlu0 %555
        %557 = vrot.lane.b32.xlu0 %v386, 4
        %v558 = vpop.permute.xlu0 %557
        %559 = vrot.lane.b32.xlu0 %v388, 4
        %v560 = vpop.permute.xlu0 %559
        %561 = vrot.lane.b32.xlu0 %v391, 4
        %v562 = vpop.permute.xlu0 %561
        %563 = vrot.lane.b32.xlu0 %v393, 4
        %v564 = vpop.permute.xlu0 %563
        %597 = vrot.lane.b32.xlu0 %v397, 8
        %v598 = vpop.permute.xlu0 %597
        %599 = vrot.lane.b32.xlu0 %v399, 8
        %v600 = vpop.permute.xlu0 %599
        %601 = vrot.lane.b32.xlu0 %v402, 8
        %v602 = vpop.permute.xlu0 %601
        %603 = vrot.lane.b32.xlu0 %v404, 8
        %v604 = vpop.permute.xlu0 %603
        %605 = vrot.lane.b32.xlu0 %v407, 8
        %v606 = vpop.permute.xlu0 %605
        %607 = vrot.lane.b32.xlu0 %v409, 8
        %v608 = vpop.permute.xlu0 %607
        %609 = vrot.lane.b32.xlu0 %v412, 8
        %v610 = vpop.permute.xlu0 %609
        %611 = vrot.lane.b32.xlu0 %v414, 8
        %v612 = vpop.permute.xlu0 %611
        %613 = vrot.lane.b32.xlu0 %v417, 8
        %v614 = vpop.permute.xlu0 %613
        %615 = vrot.lane.b32.xlu0 %v419, 8
        %v616 = vpop.permute.xlu0 %615
        %617 = vrot.lane.b32.xlu0 %v422, 8
        %v618 = vpop.permute.xlu0 %617
        %619 = vrot.lane.b32.xlu0 %v424, 8
        %v620 = vpop.permute.xlu0 %619
        %621 = vrot.lane.b32.xlu0 %v427, 8
        %v622 = vpop.permute.xlu0 %621
        %623 = vrot.lane.b32.xlu0 %v429, 8
        %v624 = vpop.permute.xlu0 %623
        %625 = vrot.lane.b32.xlu0 %v432, 8
        %v626 = vpop.permute.xlu0 %625
        %627 = vrot.lane.b32.xlu0 %v434, 8
        %v628 = vpop.permute.xlu0 %627
        %629 = vrot.lane.b32.xlu0 %v437, 8
        %v630 = vpop.permute.xlu0 %629
        %631 = vrot.lane.b32.xlu0 %v439, 8
        %v632 = vpop.permute.xlu0 %631
        %633 = vrot.lane.b32.xlu0 %v442, 8
        %v634 = vpop.permute.xlu0 %633
        %635 = vrot.lane.b32.xlu0 %v444, 8
        %v636 = vpop.permute.xlu0 %635
        %637 = vrot.lane.b32.xlu0 %v447, 8
        %v638 = vpop.permute.xlu0 %637
        %639 = vrot.lane.b32.xlu0 %v449, 8
        %v640 = vpop.permute.xlu0 %639
        %641 = vrot.lane.b32.xlu0 %v452, 8
        %v642 = vpop.permute.xlu0 %641
        %643 = vrot.lane.b32.xlu0 %v454, 8
        %v644 = vpop.permute.xlu0 %643
        %645 = vrot.lane.b32.xlu0 %v457, 8
        %v646 = vpop.permute.xlu0 %645
        %647 = vrot.lane.b32.xlu0 %v459, 8
        %v648 = vpop.permute.xlu0 %647
        %649 = vrot.lane.b32.xlu0 %v462, 8
        %v650 = vpop.permute.xlu0 %649
        %651 = vrot.lane.b32.xlu0 %v464, 8
        %v652 = vpop.permute.xlu0 %651
        %653 = vrot.lane.b32.xlu0 %v467, 8
        %v654 = vpop.permute.xlu0 %653
        %655 = vrot.lane.b32.xlu0 %v469, 8
        %v656 = vpop.permute.xlu0 %655
        %657 = vrot.lane.b32.xlu0 %v472, 8
        %v658 = vpop.permute.xlu0 %657
        %659 = vrot.lane.b32.xlu0 %v474, 8
        %v660 = vpop.permute.xlu0 %659
        %693 = vrot.lane.b32.xlu0 %v214, 12
        %v694 = vpop.permute.xlu0 %693
        %695 = vrot.lane.b32.xlu0 %v215, 12
        %v696 = vpop.permute.xlu0 %695
        %697 = vrot.lane.b32.xlu0 %v217, 12
        %v698 = vpop.permute.xlu0 %697
        %699 = vrot.lane.b32.xlu0 %v218, 12
        %v700 = vpop.permute.xlu0 %699
        %701 = vrot.lane.b32.xlu0 %v220, 12
        %v702 = vpop.permute.xlu0 %701
        %703 = vrot.lane.b32.xlu0 %v221, 12
        %v704 = vpop.permute.xlu0 %703
        %705 = vrot.lane.b32.xlu0 %v223, 12
        %v706 = vpop.permute.xlu0 %705
        %707 = vrot.lane.b32.xlu0 %v224, 12
        %v708 = vpop.permute.xlu0 %707
        %709 = vrot.lane.b32.xlu0 %v226, 12
        %v710 = vpop.permute.xlu0 %709
        %711 = vrot.lane.b32.xlu0 %v227, 12
        %v712 = vpop.permute.xlu0 %711
        %713 = vrot.lane.b32.xlu0 %v229, 12
        %v714 = vpop.permute.xlu0 %713
        %715 = vrot.lane.b32.xlu0 %v230, 12
        %v716 = vpop.permute.xlu0 %715
        %717 = vrot.lane.b32.xlu0 %v232, 12
        %v718 = vpop.permute.xlu0 %717
        %719 = vrot.lane.b32.xlu0 %v233, 12
        %v720 = vpop.permute.xlu0 %719
        %721 = vrot.lane.b32.xlu0 %v235, 12
        %v722 = vpop.permute.xlu0 %721
        %723 = vrot.lane.b32.xlu0 %v236, 12
        %v724 = vpop.permute.xlu0 %723
        %725 = vrot.lane.b32.xlu0 %v238, 12
        %v726 = vpop.permute.xlu0 %725
        %727 = vrot.lane.b32.xlu0 %v239, 12
        %v728 = vpop.permute.xlu0 %727
        %729 = vrot.lane.b32.xlu0 %v241, 12
        %v730 = vpop.permute.xlu0 %729
        %731 = vrot.lane.b32.xlu0 %v242, 12
        %v732 = vpop.permute.xlu0 %731
        %733 = vrot.lane.b32.xlu0 %v244, 12
        %v734 = vpop.permute.xlu0 %733
        %735 = vrot.lane.b32.xlu0 %v245, 12
        %v736 = vpop.permute.xlu0 %735
        %737 = vrot.lane.b32.xlu0 %v247, 12
        %v738 = vpop.permute.xlu0 %737
        %739 = vrot.lane.b32.xlu0 %v248, 12
        %v740 = vpop.permute.xlu0 %739
        %741 = vrot.lane.b32.xlu0 %v250, 12
        %v742 = vpop.permute.xlu0 %741
        %743 = vrot.lane.b32.xlu0 %v251, 12
        %v744 = vpop.permute.xlu0 %743
        %745 = vrot.lane.b32.xlu0 %v253, 12
        %v746 = vpop.permute.xlu0 %745
        %747 = vrot.lane.b32.xlu0 %v254, 12
        %v748 = vpop.permute.xlu0 %747
        %749 = vrot.lane.b32.xlu0 %v256, 12
        %v750 = vpop.permute.xlu0 %749
        %751 = vrot.lane.b32.xlu0 %v257, 12
        %v752 = vpop.permute.xlu0 %751
        %753 = vrot.lane.b32.xlu0 %v259, 12
        %v754 = vpop.permute.xlu0 %753
        %755 = vrot.lane.b32.xlu0 %v260, 12
        %v756 = vpop.permute.xlu0 %755
        %789 = vrot.lane.b32.xlu0 %v321, 16
        %v790 = vpop.permute.xlu0 %789
        %791 = vrot.lane.b32.xlu0 %v323, 16
        %v792 = vpop.permute.xlu0 %791
        %793 = vrot.lane.b32.xlu0 %v326, 16
        %v794 = vpop.permute.xlu0 %793
        %795 = vrot.lane.b32.xlu0 %v328, 16
        %v796 = vpop.permute.xlu0 %795
        %797 = vrot.lane.b32.xlu0 %v331, 16
        %v798 = vpop.permute.xlu0 %797
        %799 = vrot.lane.b32.xlu0 %v333, 16
        %v800 = vpop.permute.xlu0 %799
        %801 = vrot.lane.b32.xlu0 %v336, 16
        %v802 = vpop.permute.xlu0 %801
        %803 = vrot.lane.b32.xlu0 %v338, 16
        %v804 = vpop.permute.xlu0 %803
        %805 = vrot.lane.b32.xlu0 %v341, 16
        %v806 = vpop.permute.xlu0 %805
        %807 = vrot.lane.b32.xlu0 %v343, 16
        %v808 = vpop.permute.xlu0 %807
        %809 = vrot.lane.b32.xlu0 %v346, 16
        %v810 = vpop.permute.xlu0 %809
        %811 = vrot.lane.b32.xlu0 %v348, 16
        %v812 = vpop.permute.xlu0 %811
        %813 = vrot.lane.b32.xlu0 %v351, 16
        %v814 = vpop.permute.xlu0 %813
        %815 = vrot.lane.b32.xlu0 %v353, 16
        %v816 = vpop.permute.xlu0 %815
        %817 = vrot.lane.b32.xlu0 %v356, 16
        %v818 = vpop.permute.xlu0 %817
        %819 = vrot.lane.b32.xlu0 %v358, 16
        %v820 = vpop.permute.xlu0 %819
        %821 = vrot.lane.b32.xlu0 %v361, 16
        %v822 = vpop.permute.xlu0 %821
        %823 = vrot.lane.b32.xlu0 %v363, 16
        %v824 = vpop.permute.xlu0 %823
        %825 = vrot.lane.b32.xlu0 %v366, 16
        %v826 = vpop.permute.xlu0 %825
        %827 = vrot.lane.b32.xlu0 %v368, 16
        %v828 = vpop.permute.xlu0 %827
        %829 = vrot.lane.b32.xlu0 %v371, 16
        %v830 = vpop.permute.xlu0 %829
        %831 = vrot.lane.b32.xlu0 %v373, 16
        %v832 = vpop.permute.xlu0 %831
        %833 = vrot.lane.b32.xlu0 %v376, 16
        %v834 = vpop.permute.xlu0 %833
        %835 = vrot.lane.b32.xlu0 %v378, 16
        %v836 = vpop.permute.xlu0 %835
        %837 = vrot.lane.b32.xlu0 %v381, 16
        %v838 = vpop.permute.xlu0 %837
        %839 = vrot.lane.b32.xlu0 %v383, 16
        %v840 = vpop.permute.xlu0 %839
        %841 = vrot.lane.b32.xlu0 %v386, 16
        %v842 = vpop.permute.xlu0 %841
        %843 = vrot.lane.b32.xlu0 %v388, 16
        %v844 = vpop.permute.xlu0 %843
        %845 = vrot.lane.b32.xlu0 %v391, 16
        %v846 = vpop.permute.xlu0 %845
        %847 = vrot.lane.b32.xlu0 %v393, 16
        %v848 = vpop.permute.xlu0 %847
        %849 = vrot.lane.b32.xlu0 %v480, 16
        %v850 = vpop.permute.xlu0 %849
        %851 = vrot.lane.b32.xlu0 %v482, 16
        %v852 = vpop.permute.xlu0 %851
        %885 = vrot.lane.b32.xlu0 %v402, 20
        %v886 = vpop.permute.xlu0 %885
        %887 = vrot.lane.b32.xlu0 %v404, 20
        %v888 = vpop.permute.xlu0 %887
        %889 = vrot.lane.b32.xlu0 %v407, 20
        %v890 = vpop.permute.xlu0 %889
        %891 = vrot.lane.b32.xlu0 %v409, 20
        %v892 = vpop.permute.xlu0 %891
        %893 = vrot.lane.b32.xlu0 %v412, 20
        %v894 = vpop.permute.xlu0 %893
        %895 = vrot.lane.b32.xlu0 %v414, 20
        %v896 = vpop.permute.xlu0 %895
        %897 = vrot.lane.b32.xlu0 %v417, 20
        %v898 = vpop.permute.xlu0 %897
        %899 = vrot.lane.b32.xlu0 %v419, 20
        %v900 = vpop.permute.xlu0 %899
        %901 = vrot.lane.b32.xlu0 %v422, 20
        %v902 = vpop.permute.xlu0 %901
        %903 = vrot.lane.b32.xlu0 %v424, 20
        %v904 = vpop.permute.xlu0 %903
        %905 = vrot.lane.b32.xlu0 %v427, 20
        %v906 = vpop.permute.xlu0 %905
        %907 = vrot.lane.b32.xlu0 %v429, 20
        %v908 = vpop.permute.xlu0 %907
        %909 = vrot.lane.b32.xlu0 %v432, 20
        %v910 = vpop.permute.xlu0 %909
        %911 = vrot.lane.b32.xlu0 %v434, 20
        %v912 = vpop.permute.xlu0 %911
        %913 = vrot.lane.b32.xlu0 %v437, 20
        %v914 = vpop.permute.xlu0 %913
        %915 = vrot.lane.b32.xlu0 %v439, 20
        %v916 = vpop.permute.xlu0 %915
        %917 = vrot.lane.b32.xlu0 %v442, 20
        %v918 = vpop.permute.xlu0 %917
        %919 = vrot.lane.b32.xlu0 %v444, 20
        %v920 = vpop.permute.xlu0 %919
        %921 = vrot.lane.b32.xlu0 %v447, 20
        %v922 = vpop.permute.xlu0 %921
        %923 = vrot.lane.b32.xlu0 %v449, 20
        %v924 = vpop.permute.xlu0 %923
        %925 = vrot.lane.b32.xlu0 %v452, 20
        %v926 = vpop.permute.xlu0 %925
        %927 = vrot.lane.b32.xlu0 %v454, 20
        %v928 = vpop.permute.xlu0 %927
        %929 = vrot.lane.b32.xlu0 %v457, 20
        %v930 = vpop.permute.xlu0 %929
        %931 = vrot.lane.b32.xlu0 %v459, 20
        %v932 = vpop.permute.xlu0 %931
        %933 = vrot.lane.b32.xlu0 %v462, 20
        %v934 = vpop.permute.xlu0 %933
        %935 = vrot.lane.b32.xlu0 %v464, 20
        %v936 = vpop.permute.xlu0 %935
        %937 = vrot.lane.b32.xlu0 %v467, 20
        %v938 = vpop.permute.xlu0 %937
        %939 = vrot.lane.b32.xlu0 %v469, 20
        %v940 = vpop.permute.xlu0 %939
        %941 = vrot.lane.b32.xlu0 %v472, 20
        %v942 = vpop.permute.xlu0 %941
        %943 = vrot.lane.b32.xlu0 %v474, 20
        %v944 = vpop.permute.xlu0 %943
        %945 = vrot.lane.b32.xlu0 %v485, 20
        %v946 = vpop.permute.xlu0 %945
        %947 = vrot.lane.b32.xlu0 %v487, 20
        %v948 = vpop.permute.xlu0 %947
        %981 = vrot.lane.b32.xlu0 %v217, 24
        %v982 = vpop.permute.xlu0 %981
        %983 = vrot.lane.b32.xlu0 %v218, 24
        %v984 = vpop.permute.xlu0 %983
        %985 = vrot.lane.b32.xlu0 %v220, 24
        %v986 = vpop.permute.xlu0 %985
        %987 = vrot.lane.b32.xlu0 %v221, 24
        %v988 = vpop.permute.xlu0 %987
        %989 = vrot.lane.b32.xlu0 %v223, 24
        %v990 = vpop.permute.xlu0 %989
        %991 = vrot.lane.b32.xlu0 %v224, 24
        %v992 = vpop.permute.xlu0 %991
        %993 = vrot.lane.b32.xlu0 %v226, 24
        %v994 = vpop.permute.xlu0 %993
        %995 = vrot.lane.b32.xlu0 %v227, 24
        %v996 = vpop.permute.xlu0 %995
        %997 = vrot.lane.b32.xlu0 %v229, 24
        %v998 = vpop.permute.xlu0 %997
        %999 = vrot.lane.b32.xlu0 %v230, 24
        %v1000 = vpop.permute.xlu0 %999
        %1001 = vrot.lane.b32.xlu0 %v232, 24
        %v1002 = vpop.permute.xlu0 %1001
        %1003 = vrot.lane.b32.xlu0 %v233, 24
        %v1004 = vpop.permute.xlu0 %1003
        %1005 = vrot.lane.b32.xlu0 %v235, 24
        %v1006 = vpop.permute.xlu0 %1005
        %1007 = vrot.lane.b32.xlu0 %v236, 24
        %v1008 = vpop.permute.xlu0 %1007
        %1009 = vrot.lane.b32.xlu0 %v238, 24
        %v1010 = vpop.permute.xlu0 %1009
        %1011 = vrot.lane.b32.xlu0 %v239, 24
        %v1012 = vpop.permute.xlu0 %1011
        %1013 = vrot.lane.b32.xlu0 %v241, 24
        %v1014 = vpop.permute.xlu0 %1013
        %1015 = vrot.lane.b32.xlu0 %v242, 24
        %v1016 = vpop.permute.xlu0 %1015
        %1017 = vrot.lane.b32.xlu0 %v244, 24
        %v1018 = vpop.permute.xlu0 %1017
        %1019 = vrot.lane.b32.xlu0 %v245, 24
        %v1020 = vpop.permute.xlu0 %1019
        %1021 = vrot.lane.b32.xlu0 %v247, 24
        %v1022 = vpop.permute.xlu0 %1021
        %1023 = vrot.lane.b32.xlu0 %v248, 24
        %v1024 = vpop.permute.xlu0 %1023
        %1025 = vrot.lane.b32.xlu0 %v250, 24
        %v1026 = vpop.permute.xlu0 %1025
        %1027 = vrot.lane.b32.xlu0 %v251, 24
        %v1028 = vpop.permute.xlu0 %1027
        %1029 = vrot.lane.b32.xlu0 %v253, 24
        %v1030 = vpop.permute.xlu0 %1029
        %1031 = vrot.lane.b32.xlu0 %v254, 24
        %v1032 = vpop.permute.xlu0 %1031
        %1033 = vrot.lane.b32.xlu0 %v256, 24
        %v1034 = vpop.permute.xlu0 %1033
        %1035 = vrot.lane.b32.xlu0 %v257, 24
        %v1036 = vpop.permute.xlu0 %1035
        %1037 = vrot.lane.b32.xlu0 %v259, 24
        %v1038 = vpop.permute.xlu0 %1037
        %1039 = vrot.lane.b32.xlu0 %v260, 24
        %v1040 = vpop.permute.xlu0 %1039
        %1041 = vrot.lane.b32.xlu0 %v262, 24
        %v1042 = vpop.permute.xlu0 %1041
        %1043 = vrot.lane.b32.xlu0 %v263, 24
        %v1044 = vpop.permute.xlu0 %1043
        %1077 = vrot.lane.b32.xlu0 %v326, 28
        %v1078 = vpop.permute.xlu0 %1077
        %1079 = vrot.lane.b32.xlu0 %v328, 28
        %v1080 = vpop.permute.xlu0 %1079
        %1081 = vrot.lane.b32.xlu0 %v331, 28
        %v1082 = vpop.permute.xlu0 %1081
        %1083 = vrot.lane.b32.xlu0 %v333, 28
        %v1084 = vpop.permute.xlu0 %1083
        %1085 = vrot.lane.b32.xlu0 %v336, 28
        %v1086 = vpop.permute.xlu0 %1085
        %1087 = vrot.lane.b32.xlu0 %v338, 28
        %v1088 = vpop.permute.xlu0 %1087
        %1089 = vrot.lane.b32.xlu0 %v341, 28
        %v1090 = vpop.permute.xlu0 %1089
        %1091 = vrot.lane.b32.xlu0 %v343, 28
        %v1092 = vpop.permute.xlu0 %1091
        %1093 = vrot.lane.b32.xlu0 %v346, 28
        %v1094 = vpop.permute.xlu0 %1093
        %1095 = vrot.lane.b32.xlu0 %v348, 28
        %v1096 = vpop.permute.xlu0 %1095
        %1097 = vrot.lane.b32.xlu0 %v351, 28
        %v1098 = vpop.permute.xlu0 %1097
        %1099 = vrot.lane.b32.xlu0 %v353, 28
        %v1100 = vpop.permute.xlu0 %1099
        %1101 = vrot.lane.b32.xlu0 %v356, 28
        %v1102 = vpop.permute.xlu0 %1101
        %1103 = vrot.lane.b32.xlu0 %v358, 28
        %v1104 = vpop.permute.xlu0 %1103
        %1105 = vrot.lane.b32.xlu0 %v361, 28
        %v1106 = vpop.permute.xlu0 %1105
        %1107 = vrot.lane.b32.xlu0 %v363, 28
        %v1108 = vpop.permute.xlu0 %1107
        %1109 = vrot.lane.b32.xlu0 %v366, 28
        %v1110 = vpop.permute.xlu0 %1109
        %1111 = vrot.lane.b32.xlu0 %v368, 28
        %v1112 = vpop.permute.xlu0 %1111
        %1113 = vrot.lane.b32.xlu0 %v371, 28
        %v1114 = vpop.permute.xlu0 %1113
        %1115 = vrot.lane.b32.xlu0 %v373, 28
        %v1116 = vpop.permute.xlu0 %1115
        %1117 = vrot.lane.b32.xlu0 %v376, 28
        %v1118 = vpop.permute.xlu0 %1117
        %1119 = vrot.lane.b32.xlu0 %v378, 28
        %v1120 = vpop.permute.xlu0 %1119
        %1121 = vrot.lane.b32.xlu0 %v381, 28
        %v1122 = vpop.permute.xlu0 %1121
        %1123 = vrot.lane.b32.xlu0 %v383, 28
        %v1124 = vpop.permute.xlu0 %1123
        %1125 = vrot.lane.b32.xlu0 %v386, 28
        %v1126 = vpop.permute.xlu0 %1125
        %1127 = vrot.lane.b32.xlu0 %v388, 28
        %v1128 = vpop.permute.xlu0 %1127
        %1129 = vrot.lane.b32.xlu0 %v391, 28
        %v1130 = vpop.permute.xlu0 %1129
        %1131 = vrot.lane.b32.xlu0 %v393, 28
        %v1132 = vpop.permute.xlu0 %1131
        %1133 = vrot.lane.b32.xlu0 %v480, 28
        %v1134 = vpop.permute.xlu0 %1133
        %1135 = vrot.lane.b32.xlu0 %v482, 28
        %v1136 = vpop.permute.xlu0 %1135
        %1137 = vrot.lane.b32.xlu0 %v493, 28
        %v1138 = vpop.permute.xlu0 %1137
        %1139 = vrot.lane.b32.xlu0 %v495, 28
        %v1140 = vpop.permute.xlu0 %1139
        %1173 = vrot.lane.b32.xlu0 %v407, 32
        %v1174 = vpop.permute.xlu0 %1173
        %1175 = vrot.lane.b32.xlu0 %v409, 32
        %v1176 = vpop.permute.xlu0 %1175
        %1177 = vrot.lane.b32.xlu0 %v412, 32
        %v1178 = vpop.permute.xlu0 %1177
        %1179 = vrot.lane.b32.xlu0 %v414, 32
        %v1180 = vpop.permute.xlu0 %1179
        %1181 = vrot.lane.b32.xlu0 %v417, 32
        %v1182 = vpop.permute.xlu0 %1181
        %1183 = vrot.lane.b32.xlu0 %v419, 32
        %v1184 = vpop.permute.xlu0 %1183
        %1185 = vrot.lane.b32.xlu0 %v422, 32
        %v1186 = vpop.permute.xlu0 %1185
        %1187 = vrot.lane.b32.xlu0 %v424, 32
        %v1188 = vpop.permute.xlu0 %1187
        %1189 = vrot.lane.b32.xlu0 %v427, 32
        %v1190 = vpop.permute.xlu0 %1189
        %1191 = vrot.lane.b32.xlu0 %v429, 32
        %v1192 = vpop.permute.xlu0 %1191
        %1193 = vrot.lane.b32.xlu0 %v432, 32
        %v1194 = vpop.permute.xlu0 %1193
        %1195 = vrot.lane.b32.xlu0 %v434, 32
        %v1196 = vpop.permute.xlu0 %1195
        %1197 = vrot.lane.b32.xlu0 %v437, 32
        %v1198 = vpop.permute.xlu0 %1197
        %1199 = vrot.lane.b32.xlu0 %v439, 32
        %v1200 = vpop.permute.xlu0 %1199
        %1201 = vrot.lane.b32.xlu0 %v442, 32
        %v1202 = vpop.permute.xlu0 %1201
        %1203 = vrot.lane.b32.xlu0 %v444, 32
        %v1204 = vpop.permute.xlu0 %1203
        %1205 = vrot.lane.b32.xlu0 %v447, 32
        %v1206 = vpop.permute.xlu0 %1205
        %1207 = vrot.lane.b32.xlu0 %v449, 32
        %v1208 = vpop.permute.xlu0 %1207
        %1209 = vrot.lane.b32.xlu0 %v452, 32
        %v1210 = vpop.permute.xlu0 %1209
        %1211 = vrot.lane.b32.xlu0 %v454, 32
        %v1212 = vpop.permute.xlu0 %1211
        %1213 = vrot.lane.b32.xlu0 %v457, 32
        %v1214 = vpop.permute.xlu0 %1213
        %1215 = vrot.lane.b32.xlu0 %v459, 32
        %v1216 = vpop.permute.xlu0 %1215
        %1217 = vrot.lane.b32.xlu0 %v462, 32
        %v1218 = vpop.permute.xlu0 %1217
        %1219 = vrot.lane.b32.xlu0 %v464, 32
        %v1220 = vpop.permute.xlu0 %1219
        %1221 = vrot.lane.b32.xlu0 %v467, 32
        %v1222 = vpop.permute.xlu0 %1221
        %1223 = vrot.lane.b32.xlu0 %v469, 32
        %v1224 = vpop.permute.xlu0 %1223
        %1225 = vrot.lane.b32.xlu0 %v472, 32
        %v1226 = vpop.permute.xlu0 %1225
        %1227 = vrot.lane.b32.xlu0 %v474, 32
        %v1228 = vpop.permute.xlu0 %1227
        %1229 = vrot.lane.b32.xlu0 %v485, 32
        %v1230 = vpop.permute.xlu0 %1229
        %1231 = vrot.lane.b32.xlu0 %v487, 32
        %v1232 = vpop.permute.xlu0 %1231
        %1233 = vrot.lane.b32.xlu0 %v498, 32
        %v1234 = vpop.permute.xlu0 %1233
        %1235 = vrot.lane.b32.xlu0 %v500, 32
        %v1236 = vpop.permute.xlu0 %1235
        %vm1269 = vcmask 31744
        %v1270 = vsel %vm1269, %v211, %v502
        %v1271 = vsel %vm1269, %v212, %v504
        %v1272 = vsel %vm1269, %v214, %v506
        %v1273 = vsel %vm1269, %v215, %v508
        %v1274 = vsel %vm1269, %v217, %v510
        %v1275 = vsel %vm1269, %v218, %v512
        %v1276 = vsel %vm1269, %v220, %v514
        %v1277 = vsel %vm1269, %v221, %v516
        %v1278 = vsel %vm1269, %v223, %v518
        %v1279 = vsel %vm1269, %v224, %v520
        %v1280 = vsel %vm1269, %v226, %v522
        %v1281 = vsel %vm1269, %v227, %v524
        %v1282 = vsel %vm1269, %v229, %v526
        %v1283 = vsel %vm1269, %v230, %v528
        %v1284 = vsel %vm1269, %v232, %v530
        %v1285 = vsel %vm1269, %v233, %v532
        %v1286 = vsel %vm1269, %v235, %v534
        %v1287 = vsel %vm1269, %v236, %v536
        %v1288 = vsel %vm1269, %v238, %v538
        %v1289 = vsel %vm1269, %v239, %v540
        %v1290 = vsel %vm1269, %v241, %v542
        %v1291 = vsel %vm1269, %v242, %v544
        %v1292 = vsel %vm1269, %v244, %v546
        %v1293 = vsel %vm1269, %v245, %v548
        %v1294 = vsel %vm1269, %v247, %v550
        %v1295 = vsel %vm1269, %v248, %v552
        %v1296 = vsel %vm1269, %v250, %v554
        %v1297 = vsel %vm1269, %v251, %v556
        %v1298 = vsel %vm1269, %v253, %v558
        %v1299 = vsel %vm1269, %v254, %v560
        %v1300 = vsel %vm1269, %v256, %v562
        %v1301 = vsel %vm1269, %v257, %v564
        %vm1302 = vcmask 64512
        %v1303 = vsel %vm1302, %v1270, %v598
        %v1304 = vsel %vm1302, %v1271, %v600
        %v1305 = vsel %vm1302, %v1272, %v602
        %v1306 = vsel %vm1302, %v1273, %v604
        %v1307 = vsel %vm1302, %v1274, %v606
        %v1308 = vsel %vm1302, %v1275, %v608
        %v1309 = vsel %vm1302, %v1276, %v610
        %v1310 = vsel %vm1302, %v1277, %v612
        %v1311 = vsel %vm1302, %v1278, %v614
        %v1312 = vsel %vm1302, %v1279, %v616
        %v1313 = vsel %vm1302, %v1280, %v618
        %v1314 = vsel %vm1302, %v1281, %v620
        %v1315 = vsel %vm1302, %v1282, %v622
        %v1316 = vsel %vm1302, %v1283, %v624
        %v1317 = vsel %vm1302, %v1284, %v626
        %v1318 = vsel %vm1302, %v1285, %v628
        %v1319 = vsel %vm1302, %v1286, %v630
        %v1320 = vsel %vm1302, %v1287, %v632
        %v1321 = vsel %vm1302, %v1288, %v634
        %v1322 = vsel %vm1302, %v1289, %v636
        %v1323 = vsel %vm1302, %v1290, %v638
        %v1324 = vsel %vm1302, %v1291, %v640
        %v1325 = vsel %vm1302, %v1292, %v642
        %v1326 = vsel %vm1302, %v1293, %v644
        %v1327 = vsel %vm1302, %v1294, %v646
        %v1328 = vsel %vm1302, %v1295, %v648
        %v1329 = vsel %vm1302, %v1296, %v650
        %v1330 = vsel %vm1302, %v1297, %v652
        %v1331 = vsel %vm1302, %v1298, %v654
        %v1332 = vsel %vm1302, %v1299, %v656
        %v1333 = vsel %vm1302, %v1300, %v658
        %v1334 = vsel %vm1302, %v1301, %v660
        %vm1335 = vcmask 97280
        %v1336 = vsel %vm1335, %v1303, %v694
        %v1337 = vsel %vm1335, %v1304, %v696
        %v1338 = vsel %vm1335, %v1305, %v698
        %v1339 = vsel %vm1335, %v1306, %v700
        %v1340 = vsel %vm1335, %v1307, %v702
        %v1341 = vsel %vm1335, %v1308, %v704
        %v1342 = vsel %vm1335, %v1309, %v706
        %v1343 = vsel %vm1335, %v1310, %v708
        %v1344 = vsel %vm1335, %v1311, %v710
        %v1345 = vsel %vm1335, %v1312, %v712
        %v1346 = vsel %vm1335, %v1313, %v714
        %v1347 = vsel %vm1335, %v1314, %v716
        %v1348 = vsel %vm1335, %v1315, %v718
        %v1349 = vsel %vm1335, %v1316, %v720
        %v1350 = vsel %vm1335, %v1317, %v722
        %v1351 = vsel %vm1335, %v1318, %v724
        %v1352 = vsel %vm1335, %v1319, %v726
        %v1353 = vsel %vm1335, %v1320, %v728
        %v1354 = vsel %vm1335, %v1321, %v730
        %v1355 = vsel %vm1335, %v1322, %v732
        %v1356 = vsel %vm1335, %v1323, %v734
        %v1357 = vsel %vm1335, %v1324, %v736
        %v1358 = vsel %vm1335, %v1325, %v738
        %v1359 = vsel %vm1335, %v1326, %v740
        %v1360 = vsel %vm1335, %v1327, %v742
        %v1361 = vsel %vm1335, %v1328, %v744
        %v1362 = vsel %vm1335, %v1329, %v746
        %v1363 = vsel %vm1335, %v1330, %v748
        %v1364 = vsel %vm1335, %v1331, %v750
        %v1365 = vsel %vm1335, %v1332, %v752
        %v1366 = vsel %vm1335, %v1333, %v754
        %v1367 = vsel %vm1335, %v1334, %v756
        %vm1368 = vcmask 130048
        %v1369 = vsel %vm1368, %v1336, %v790
        %v1370 = vsel %vm1368, %v1337, %v792
        %v1371 = vsel %vm1368, %v1338, %v794
        %v1372 = vsel %vm1368, %v1339, %v796
        %v1373 = vsel %vm1368, %v1340, %v798
        %v1374 = vsel %vm1368, %v1341, %v800
        %v1375 = vsel %vm1368, %v1342, %v802
        %v1376 = vsel %vm1368, %v1343, %v804
        %v1377 = vsel %vm1368, %v1344, %v806
        %v1378 = vsel %vm1368, %v1345, %v808
        %v1379 = vsel %vm1368, %v1346, %v810
        %v1380 = vsel %vm1368, %v1347, %v812
        %v1381 = vsel %vm1368, %v1348, %v814
        %v1382 = vsel %vm1368, %v1349, %v816
        %v1383 = vsel %vm1368, %v1350, %v818
        %v1384 = vsel %vm1368, %v1351, %v820
        %v1385 = vsel %vm1368, %v1352, %v822
        %v1386 = vsel %vm1368, %v1353, %v824
        %v1387 = vsel %vm1368, %v1354, %v826
        %v1388 = vsel %vm1368, %v1355, %v828
        %v1389 = vsel %vm1368, %v1356, %v830
        %v1390 = vsel %vm1368, %v1357, %v832
        %v1391 = vsel %vm1368, %v1358, %v834
        %v1392 = vsel %vm1368, %v1359, %v836
        %v1393 = vsel %vm1368, %v1360, %v838
        %v1394 = vsel %vm1368, %v1361, %v840
        %v1395 = vsel %vm1368, %v1362, %v842
        %v1396 = vsel %vm1368, %v1363, %v844
        %v1397 = vsel %vm1368, %v1364, %v846
        %v1398 = vsel %vm1368, %v1365, %v848
        %v1399 = vsel %vm1368, %v1366, %v850
        %v1400 = vsel %vm1368, %v1367, %v852
        %vm1401 = vcmask 162816
        %v1402 = vsel %vm1401, %v1369, %v886
        %v1403 = vsel %vm1401, %v1370, %v888
        %v1404 = vsel %vm1401, %v1371, %v890
        %v1405 = vsel %vm1401, %v1372, %v892
        %v1406 = vsel %vm1401, %v1373, %v894
        %v1407 = vsel %vm1401, %v1374, %v896
        %v1408 = vsel %vm1401, %v1375, %v898
        %v1409 = vsel %vm1401, %v1376, %v900
        %v1410 = vsel %vm1401, %v1377, %v902
        %v1411 = vsel %vm1401, %v1378, %v904
        %v1412 = vsel %vm1401, %v1379, %v906
        %v1413 = vsel %vm1401, %v1380, %v908
        %v1414 = vsel %vm1401, %v1381, %v910
        %v1415 = vsel %vm1401, %v1382, %v912
        %v1416 = vsel %vm1401, %v1383, %v914
        %v1417 = vsel %vm1401, %v1384, %v916
        %v1418 = vsel %vm1401, %v1385, %v918
        %v1419 = vsel %vm1401, %v1386, %v920
        %v1420 = vsel %vm1401, %v1387, %v922
        %v1421 = vsel %vm1401, %v1388, %v924
        %v1422 = vsel %vm1401, %v1389, %v926
        %v1423 = vsel %vm1401, %v1390, %v928
        %v1424 = vsel %vm1401, %v1391, %v930
        %v1425 = vsel %vm1401, %v1392, %v932
        %v1426 = vsel %vm1401, %v1393, %v934
        %v1427 = vsel %vm1401, %v1394, %v936
        %v1428 = vsel %vm1401, %v1395, %v938
        %v1429 = vsel %vm1401, %v1396, %v940
        %v1430 = vsel %vm1401, %v1397, %v942
        %v1431 = vsel %vm1401, %v1398, %v944
        %v1432 = vsel %vm1401, %v1399, %v946
        %v1433 = vsel %vm1401, %v1400, %v948
        %vm1434 = vcmask 195584
        %v1435 = vsel %vm1434, %v1402, %v982
        %v1436 = vsel %vm1434, %v1403, %v984
        %v1437 = vsel %vm1434, %v1404, %v986
        %v1438 = vsel %vm1434, %v1405, %v988
        %v1439 = vsel %vm1434, %v1406, %v990
        %v1440 = vsel %vm1434, %v1407, %v992
        %v1441 = vsel %vm1434, %v1408, %v994
        %v1442 = vsel %vm1434, %v1409, %v996
        %v1443 = vsel %vm1434, %v1410, %v998
        %v1444 = vsel %vm1434, %v1411, %v1000
        %v1445 = vsel %vm1434, %v1412, %v1002
        %v1446 = vsel %vm1434, %v1413, %v1004
        %v1447 = vsel %vm1434, %v1414, %v1006
        %v1448 = vsel %vm1434, %v1415, %v1008
        %v1449 = vsel %vm1434, %v1416, %v1010
        %v1450 = vsel %vm1434, %v1417, %v1012
        %v1451 = vsel %vm1434, %v1418, %v1014
        %v1452 = vsel %vm1434, %v1419, %v1016
        %v1453 = vsel %vm1434, %v1420, %v1018
        %v1454 = vsel %vm1434, %v1421, %v1020
        %v1455 = vsel %vm1434, %v1422, %v1022
        %v1456 = vsel %vm1434, %v1423, %v1024
        %v1457 = vsel %vm1434, %v1424, %v1026
        %v1458 = vsel %vm1434, %v1425, %v1028
        %v1459 = vsel %vm1434, %v1426, %v1030
        %v1460 = vsel %vm1434, %v1427, %v1032
        %v1461 = vsel %vm1434, %v1428, %v1034
        %v1462 = vsel %vm1434, %v1429, %v1036
        %v1463 = vsel %vm1434, %v1430, %v1038
        %v1464 = vsel %vm1434, %v1431, %v1040
        %v1465 = vsel %vm1434, %v1432, %v1042
        %v1466 = vsel %vm1434, %v1433, %v1044
        %vm1467 = vcmask 228352
        %v1468 = vsel %vm1467, %v1435, %v1078
        %v1469 = vsel %vm1467, %v1436, %v1080
        %v1470 = vsel %vm1467, %v1437, %v1082
        %v1471 = vsel %vm1467, %v1438, %v1084
        %v1472 = vsel %vm1467, %v1439, %v1086
        %v1473 = vsel %vm1467, %v1440, %v1088
        %v1474 = vsel %vm1467, %v1441, %v1090
        %v1475 = vsel %vm1467, %v1442, %v1092
        %v1476 = vsel %vm1467, %v1443, %v1094
        %v1477 = vsel %vm1467, %v1444, %v1096
        %v1478 = vsel %vm1467, %v1445, %v1098
        %v1479 = vsel %vm1467, %v1446, %v1100
        %v1480 = vsel %vm1467, %v1447, %v1102
        %v1481 = vsel %vm1467, %v1448, %v1104
        %v1482 = vsel %vm1467, %v1449, %v1106
        %v1483 = vsel %vm1467, %v1450, %v1108
        %v1484 = vsel %vm1467, %v1451, %v1110
        %v1485 = vsel %vm1467, %v1452, %v1112
        %v1486 = vsel %vm1467, %v1453, %v1114
        %v1487 = vsel %vm1467, %v1454, %v1116
        %v1488 = vsel %vm1467, %v1455, %v1118
        %v1489 = vsel %vm1467, %v1456, %v1120
        %v1490 = vsel %vm1467, %v1457, %v1122
        %v1491 = vsel %vm1467, %v1458, %v1124
        %v1492 = vsel %vm1467, %v1459, %v1126
        %v1493 = vsel %vm1467, %v1460, %v1128
        %v1494 = vsel %vm1467, %v1461, %v1130
        %v1495 = vsel %vm1467, %v1462, %v1132
        %v1496 = vsel %vm1467, %v1463, %v1134
        %v1497 = vsel %vm1467, %v1464, %v1136
        %v1498 = vsel %vm1467, %v1465, %v1138
        %v1499 = vsel %vm1467, %v1466, %v1140
        %vm1500 = vcmask 261120
        %v1501 = vsel %vm1500, %v1468, %v1174
        %v1502 = vsel %vm1500, %v1469, %v1176
        %v1503 = vsel %vm1500, %v1470, %v1178
        %v1504 = vsel %vm1500, %v1471, %v1180
        %v1505 = vsel %vm1500, %v1472, %v1182
        %v1506 = vsel %vm1500, %v1473, %v1184
        %v1507 = vsel %vm1500, %v1474, %v1186
        %v1508 = vsel %vm1500, %v1475, %v1188
        %v1509 = vsel %vm1500, %v1476, %v1190
        %v1510 = vsel %vm1500, %v1477, %v1192
        %v1511 = vsel %vm1500, %v1478, %v1194
        %v1512 = vsel %vm1500, %v1479, %v1196
        %v1513 = vsel %vm1500, %v1480, %v1198
        %v1514 = vsel %vm1500, %v1481, %v1200
        %v1515 = vsel %vm1500, %v1482, %v1202
        %v1516 = vsel %vm1500, %v1483, %v1204
        %v1517 = vsel %vm1500, %v1484, %v1206
        %v1518 = vsel %vm1500, %v1485, %v1208
        %v1519 = vsel %vm1500, %v1486, %v1210
        %v1520 = vsel %vm1500, %v1487, %v1212
        %v1521 = vsel %vm1500, %v1488, %v1214
        %v1522 = vsel %vm1500, %v1489, %v1216
        %v1523 = vsel %vm1500, %v1490, %v1218
        %v1524 = vsel %vm1500, %v1491, %v1220
        %v1525 = vsel %vm1500, %v1492, %v1222
        %v1526 = vsel %vm1500, %v1493, %v1224
        %v1527 = vsel %vm1500, %v1494, %v1226
        %v1528 = vsel %vm1500, %v1495, %v1228
        %v1529 = vsel %vm1500, %v1496, %v1230
        %v1530 = vsel %vm1500, %v1497, %v1232
        %v1531 = vsel %vm1500, %v1498, %v1234
        %v1532 = vsel %vm1500, %v1499, %v1236
        %v1533 = vld [vmem:[%s1] sm:$0xff]
        %v1534 = vld [vmem:[%s1 + $0x8] sm:$0xff]
        %v1535 = vld [vmem:[%s1 + $0x10] sm:$0xff]
        %v1536 = vld [vmem:[%s1 + $0x18] sm:$0xff]
        %v1537 = vld [vmem:[%s1 + $0x20] sm:$0xf]
        %vm1538 = vcmask 293888
        %v1540 = vsel %vm1538, %v1501, 0
        %v1543 = vsel %vm1538, %v1502, 0
        %v1546 = vsel %vm1538, %v1503, 0
        %v1549 = vsel %vm1538, %v1504, 0
        %v1552 = vsel %vm1538, %v1505, 0
        %v1555 = vsel %vm1538, %v1506, 0
        %v1558 = vsel %vm1538, %v1507, 0
        %v1561 = vsel %vm1538, %v1508, 0
        %v1564 = vsel %vm1538, %v1509, 0
        %v1567 = vsel %vm1538, %v1510, 0
        %v1570 = vsel %vm1538, %v1511, 0
        %v1573 = vsel %vm1538, %v1512, 0
        %v1576 = vsel %vm1538, %v1513, 0
        %v1579 = vsel %vm1538, %v1514, 0
        %v1582 = vsel %vm1538, %v1515, 0
        %v1585 = vsel %vm1538, %v1516, 0
        %v1588 = vsel %vm1538, %v1517, 0
        %v1591 = vsel %vm1538, %v1518, 0
        %v1594 = vsel %vm1538, %v1519, 0
        %v1597 = vsel %vm1538, %v1520, 0
        %v1600 = vsel %vm1538, %v1521, 0
        %v1603 = vsel %vm1538, %v1522, 0
        %v1606 = vsel %vm1538, %v1523, 0
        %v1609 = vsel %vm1538, %v1524, 0
        %v1612 = vsel %vm1538, %v1525, 0
        %v1615 = vsel %vm1538, %v1526, 0
        %v1618 = vsel %vm1538, %v1527, 0
        %v1621 = vsel %vm1538, %v1528, 0
        %v1624 = vsel %vm1538, %v1529, 0
        %v1627 = vsel %vm1538, %v1530, 0
        %v1630 = vsel %vm1538, %v1531, 0
        %v1633 = vsel %vm1538, %v1532, 0
        %vm1635 = vcmask 1043456
        %v1637 = vsel %vm1635, %v1537, 0
        %1639 = vmatprep.subr.mxu0 0.0
        %1640 = vmatpush1.msra.mxu0 %v1533
        %1641 = vmatprep.subr.mxu0 0.0
        %1642 = vmatpush1.msra.mxu0 %v1534
        %1643 = vmatprep.subr.mxu0 0.0
        %1644 = vmatpush1.msra.mxu0 %v1535
        %1645 = vmatprep.subr.mxu0 0.0
        %1646 = vmatpush1.msra.mxu0 %v1536
        %1647 = vmatprep.subr.mxu0 0.0
        %1648 = vmatpush1.msra.mxu0 %v1637
        %1649 = vmatprep.subr.mxu0 0.0
        %1650 = vmatpush1.msra.mxu0 0.0
        %1651 = vmatprep.subr.mxu0 0.0
        %1652 = vmatpush1.msra.mxu0 0.0
        %1653 = vmatprep.subr.mxu0 0.0
        %1654 = vmatpush1.msra.mxu0 0.0
        %1655 = vmatprep.subr.mxu0 0.0
        %1656 = vmatpush1.msra.mxu0 0.0
        %1657 = vmatprep.subr.mxu0 0.0
        %1658 = vmatpush1.msra.mxu0 0.0
        %1659 = vmatprep.subr.mxu0 0.0
        %1660 = vmatpush1.msra.mxu0 0.0
        %1661 = vmatprep.subr.mxu0 0.0
        %1662 = vmatpush1.msra.mxu0 0.0
        %1663 = vmatprep.subr.mxu0 0.0
        %1664 = vmatpush1.msra.mxu0 0.0
        %1665 = vmatprep.subr.mxu0 0.0
        %1666 = vmatpush1.msra.mxu0 0.0
        %1667 = vmatprep.subr.mxu0 0.0
        %1668 = vmatpush1.msra.mxu0 0.0
        %1669 = vmatprep.subr.mxu0 0.0
        %1670 = vmatpush1.msra.mxu0 0.0
        %1671 = vmatprep.subr.mxu0 0.0
        %1672 = vmatpush1.msra.mxu0 0.0
        %1673 = vmatprep.subr.mxu0 0.0
        %1674 = vmatpush1.msra.mxu0 0.0
        %1675 = vmatprep.subr.mxu0 0.0
        %1676 = vmatpush1.msra.mxu0 0.0
        %1677 = vmatprep.subr.mxu0 0.0
        %1678 = vmatpush1.msra.mxu0 0.0
        %1679 = vmatprep.subr.mxu0 0.0
        %1680 = vmatpush1.msra.mxu0 0.0
        %1681 = vmatprep.subr.mxu0 0.0
        %1682 = vmatpush1.msra.mxu0 0.0
        %1683 = vmatprep.subr.mxu0 0.0
        %1684 = vmatpush1.msra.mxu0 0.0
        %1685 = vmatprep.subr.mxu0 0.0
        %1686 = vmatpush1.msra.mxu0 0.0
        %1687 = vmatprep.subr.mxu0 0.0
        %1688 = vmatpush1.msra.mxu0 0.0
        %1689 = vmatprep.subr.mxu0 0.0
        %1690 = vmatpush1.msra.mxu0 0.0
        %1691 = vmatprep.subr.mxu0 0.0
        %1692 = vmatpush1.msra.mxu0 0.0
        %1693 = vmatprep.subr.mxu0 0.0
        %1694 = vmatpush1.msra.mxu0 0.0
        %1695 = vmatprep.subr.mxu0 0.0
        %1696 = vmatpush1.msra.mxu0 0.0
        %1697 = vmatprep.subr.mxu0 0.0
        %1698 = vmatpush1.msra.mxu0 0.0
        %1699 = vmatprep.subr.mxu0 0.0
        %1700 = vmatpush1.msra.mxu0 0.0
        %1701 = vmatprep.subr.mxu0 0.0
        %1702 = vmatpush1.msra.mxu0 0.0
        %1703 = vmatprep.mubr.f32.mxu0 0.0
        %1704 = vmatmul.mubr.f32.gmra.mrb[0].mxu0 %v1540
        %v1705 = vpop.f32.mrb[0].mxu0
        %v1706 = vadd.f32 0.0, %v1705
        %v1707 = vpop.f32.mrb[0].mxu0
        %1708 = vmatprep.mubr.f32.mxu0 0.0
        %1709 = vmatmul.mubr.f32.gmra.mrb[0].mxu0 %v1543
        %v1710 = vpop.f32.mrb[0].mxu0
        %v1711 = vadd.f32 0.0, %v1710
        %v1712 = vpop.f32.mrb[0].mxu0
        %1713 = vmatprep.mubr.f32.mxu0 0.0
        %1714 = vmatmul.mubr.f32.gmra.mrb[0].mxu0 %v1546
        %v1715 = vpop.f32.mrb[0].mxu0
        %v1716 = vadd.f32 0.0, %v1715
        %v1717 = vpop.f32.mrb[0].mxu0
        %1718 = vmatprep.mubr.f32.mxu0 0.0
        %1719 = vmatmul.mubr.f32.gmra.mrb[0].mxu0 %v1549
        %v1720 = vpop.f32.mrb[0].mxu0
        %v1721 = vadd.f32 0.0, %v1720
        %v1722 = vpop.f32.mrb[0].mxu0
        %1723 = vmatprep.mubr.f32.mxu0 0.0
        %1724 = vmatmul.mubr.f32.gmra.mrb[0].mxu0 %v1552
        %v1725 = vpop.f32.mrb[0].mxu0
        %v1726 = vadd.f32 0.0, %v1725
        %v1727 = vpop.f32.mrb[0].mxu0
        %1728 = vmatprep.mubr.f32.mxu0 0.0
        %1729 = vmatmul.mubr.f32.gmra.mrb[0].mxu0 %v1555
        %v1730 = vpop.f32.mrb[0].mxu0
        %v1731 = vadd.f32 0.0, %v1730
        %v1732 = vpop.f32.mrb[0].mxu0
        %1733 = vmatprep.mubr.f32.mxu0 0.0
        %1734 = vmatmul.mubr.f32.gmra.mrb[0].mxu0 %v1558
        %v1735 = vpop.f32.mrb[0].mxu0
        %v1736 = vadd.f32 0.0, %v1735
        %v1737 = vpop.f32.mrb[0].mxu0
        %1738 = vmatprep.mubr.f32.mxu0 0.0
        %1739 = vmatmul.mubr.f32.gmra.mrb[0].mxu0 %v1561
        %v1740 = vpop.f32.mrb[0].mxu0
        %v1741 = vadd.f32 0.0, %v1740
        %v1742 = vpop.f32.mrb[0].mxu0
        %1743 = vmatprep.mubr.f32.mxu0 0.0
        %1744 = vmatmul.mubr.f32.gmra.mrb[0].mxu0 %v1564
        %v1745 = vpop.f32.mrb[0].mxu0
        %v1746 = vadd.f32 0.0, %v1745
        %v1747 = vpop.f32.mrb[0].mxu0
        %1748 = vmatprep.mubr.f32.mxu0 0.0
        %1749 = vmatmul.mubr.f32.gmra.mrb[0].mxu0 %v1567
        %v1750 = vpop.f32.mrb[0].mxu0
        %v1751 = vadd.f32 0.0, %v1750
        %v1752 = vpop.f32.mrb[0].mxu0
        %1753 = vmatprep.mubr.f32.mxu0 0.0
        %1754 = vmatmul.mubr.f32.gmra.mrb[0].mxu0 %v1570
        %v1755 = vpop.f32.mrb[0].mxu0
        %v1756 = vadd.f32 0.0, %v1755
        %v1757 = vpop.f32.mrb[0].mxu0
        %1758 = vmatprep.mubr.f32.mxu0 0.0
        %1759 = vmatmul.mubr.f32.gmra.mrb[0].mxu0 %v1573
        %v1760 = vpop.f32.mrb[0].mxu0
        %v1761 = vadd.f32 0.0, %v1760
        %v1762 = vpop.f32.mrb[0].mxu0
        %1763 = vmatprep.mubr.f32.mxu0 0.0
        %1764 = vmatmul.mubr.f32.gmra.mrb[0].mxu0 %v1576
        %v1765 = vpop.f32.mrb[0].mxu0
        %v1766 = vadd.f32 0.0, %v1765
        %v1767 = vpop.f32.mrb[0].mxu0
        %1768 = vmatprep.mubr.f32.mxu0 0.0
        %1769 = vmatmul.mubr.f32.gmra.mrb[0].mxu0 %v1579
        %v1770 = vpop.f32.mrb[0].mxu0
        %v1771 = vadd.f32 0.0, %v1770
        %v1772 = vpop.f32.mrb[0].mxu0
        %1773 = vmatprep.mubr.f32.mxu0 0.0
        %1774 = vmatmul.mubr.f32.gmra.mrb[0].mxu0 %v1582
        %v1775 = vpop.f32.mrb[0].mxu0
        %v1776 = vadd.f32 0.0, %v1775
        %v1777 = vpop.f32.mrb[0].mxu0
        %1778 = vmatprep.mubr.f32.mxu0 0.0
        %1779 = vmatmul.mubr.f32.gmra.mrb[0].mxu0 %v1585
        %v1780 = vpop.f32.mrb[0].mxu0
        %v1781 = vadd.f32 0.0, %v1780
        %v1782 = vpop.f32.mrb[0].mxu0
        %1783 = vmatprep.mubr.f32.mxu0 0.0
        %1784 = vmatmul.mubr.f32.gmra.mrb[0].mxu0 %v1588
        %v1785 = vpop.f32.mrb[0].mxu0
        %v1786 = vadd.f32 0.0, %v1785
        %v1787 = vpop.f32.mrb[0].mxu0
        %1788 = vmatprep.mubr.f32.mxu0 0.0
        %1789 = vmatmul.mubr.f32.gmra.mrb[0].mxu0 %v1591
        %v1790 = vpop.f32.mrb[0].mxu0
        %v1791 = vadd.f32 0.0, %v1790
        %v1792 = vpop.f32.mrb[0].mxu0
        %1793 = vmatprep.mubr.f32.mxu0 0.0
        %1794 = vmatmul.mubr.f32.gmra.mrb[0].mxu0 %v1594
        %v1795 = vpop.f32.mrb[0].mxu0
        %v1796 = vadd.f32 0.0, %v1795
        %v1797 = vpop.f32.mrb[0].mxu0
        %1798 = vmatprep.mubr.f32.mxu0 0.0
        %1799 = vmatmul.mubr.f32.gmra.mrb[0].mxu0 %v1597
        %v1800 = vpop.f32.mrb[0].mxu0
        %v1801 = vadd.f32 0.0, %v1800
        %v1802 = vpop.f32.mrb[0].mxu0
        %1803 = vmatprep.mubr.f32.mxu0 0.0
        %1804 = vmatmul.mubr.f32.gmra.mrb[0].mxu0 %v1600
        %v1805 = vpop.f32.mrb[0].mxu0
        %v1806 = vadd.f32 0.0, %v1805
        %v1807 = vpop.f32.mrb[0].mxu0
        %1808 = vmatprep.mubr.f32.mxu0 0.0
        %1809 = vmatmul.mubr.f32.gmra.mrb[0].mxu0 %v1603
        %v1810 = vpop.f32.mrb[0].mxu0
        %v1811 = vadd.f32 0.0, %v1810
        %v1812 = vpop.f32.mrb[0].mxu0
        %1813 = vmatprep.mubr.f32.mxu0 0.0
        %1814 = vmatmul.mubr.f32.gmra.mrb[0].mxu0 %v1606
        %v1815 = vpop.f32.mrb[0].mxu0
        %v1816 = vadd.f32 0.0, %v1815
        %v1817 = vpop.f32.mrb[0].mxu0
        %1818 = vmatprep.mubr.f32.mxu0 0.0
        %1819 = vmatmul.mubr.f32.gmra.mrb[0].mxu0 %v1609
        %v1820 = vpop.f32.mrb[0].mxu0
        %v1821 = vadd.f32 0.0, %v1820
        %v1822 = vpop.f32.mrb[0].mxu0
        %1823 = vmatprep.mubr.f32.mxu0 0.0
        %1824 = vmatmul.mubr.f32.gmra.mrb[0].mxu0 %v1612
        %v1825 = vpop.f32.mrb[0].mxu0
        %v1826 = vadd.f32 0.0, %v1825
        %v1827 = vpop.f32.mrb[0].mxu0
        %1828 = vmatprep.mubr.f32.mxu0 0.0
        %1829 = vmatmul.mubr.f32.gmra.mrb[0].mxu0 %v1615
        %v1830 = vpop.f32.mrb[0].mxu0
        %v1831 = vadd.f32 0.0, %v1830
        %v1832 = vpop.f32.mrb[0].mxu0
        %1833 = vmatprep.mubr.f32.mxu0 0.0
        %1834 = vmatmul.mubr.f32.gmra.mrb[0].mxu0 %v1618
        %v1835 = vpop.f32.mrb[0].mxu0
        %v1836 = vadd.f32 0.0, %v1835
        %v1837 = vpop.f32.mrb[0].mxu0
        %1838 = vmatprep.mubr.f32.mxu0 0.0
        %1839 = vmatmul.mubr.f32.gmra.mrb[0].mxu0 %v1621
        %v1840 = vpop.f32.mrb[0].mxu0
        %v1841 = vadd.f32 0.0, %v1840
        %v1842 = vpop.f32.mrb[0].mxu0
        %1843 = vmatprep.mubr.f32.mxu0 0.0
        %1844 = vmatmul.mubr.f32.gmra.mrb[0].mxu0 %v1624
        %v1845 = vpop.f32.mrb[0].mxu0
        %v1846 = vadd.f32 0.0, %v1845
        %v1847 = vpop.f32.mrb[0].mxu0
        %1848 = vmatprep.mubr.f32.mxu0 0.0
        %1849 = vmatmul.mubr.f32.gmra.mrb[0].mxu0 %v1627
        %v1850 = vpop.f32.mrb[0].mxu0
        %v1851 = vadd.f32 0.0, %v1850
        %v1852 = vpop.f32.mrb[0].mxu0
        %1853 = vmatprep.mubr.f32.mxu0 0.0
        %1854 = vmatmul.mubr.f32.gmra.mrb[0].mxu0 %v1630
        %v1855 = vpop.f32.mrb[0].mxu0
        %v1856 = vadd.f32 0.0, %v1855
        %v1857 = vpop.f32.mrb[0].mxu0
        %1858 = vmatprep.mubr.f32.mxu0 0.0
        %1859 = vmatmul.mubr.f32.gmra.mrb[0].mxu0 %v1633
        %v1860 = vpop.f32.mrb[0].mxu0
        %v1861 = vadd.f32 0.0, %v1860
        %v1862 = vpop.f32.mrb[0].mxu0
        %1863 = vdwg.mxu0
        %1864 = vst [vmem:[%s193] sm:$0xff] %v1706
        %1865 = vst [vmem:[%s193 + $0x8] sm:$0xff] %v1711
        %1866 = vst [vmem:[%s193 + $0x10] sm:$0xff] %v1716
        %1867 = vst [vmem:[%s193 + $0x18] sm:$0xff] %v1721
        %1868 = vst [vmem:[%s193 + $0x20] sm:$0xff] %v1726
        %1869 = vst [vmem:[%s193 + $0x28] sm:$0xff] %v1731
        %1870 = vst [vmem:[%s193 + $0x30] sm:$0xff] %v1736
        %1871 = vst [vmem:[%s193 + $0x38] sm:$0xff] %v1741
        %1872 = vst [vmem:[%s193 + $0x40] sm:$0xff] %v1746
        %1873 = vst [vmem:[%s193 + $0x48] sm:$0xff] %v1751
        %1874 = vst [vmem:[%s193 + $0x50] sm:$0xff] %v1756
        %1875 = vst [vmem:[%s193 + $0x58] sm:$0xff] %v1761
        %1876 = vst [vmem:[%s193 + $0x60] sm:$0xff] %v1766
        %1877 = vst [vmem:[%s193 + $0x68] sm:$0xff] %v1771
        %1878 = vst [vmem:[%s193 + $0x70] sm:$0xff] %v1776
        %1879 = vst [vmem:[%s193 + $0x78] sm:$0xff] %v1781
        %1880 = vst [vmem:[%s193 + $0x80] sm:$0xff] %v1786
        %1881 = vst [vmem:[%s193 + $0x88] sm:$0xff] %v1791
        %1882 = vst [vmem:[%s193 + $0x90] sm:$0xff] %v1796
        %1883 = vst [vmem:[%s193 + $0x98] sm:$0xff] %v1801
        %1884 = vst [vmem:[%s193 + $0xa0] sm:$0xff] %v1806
        %1885 = vst [vmem:[%s193 + $0xa8] sm:$0xff] %v1811
        %1886 = vst [vmem:[%s193 + $0xb0] sm:$0xff] %v1816
        %1887 = vst [vmem:[%s193 + $0xb8] sm:$0xff] %v1821
        %1888 = vst [vmem:[%s193 + $0xc0] sm:$0xff] %v1826
        %1889 = vst [vmem:[%s193 + $0xc8] sm:$0xff] %v1831
        %1890 = vst [vmem:[%s193 + $0xd0] sm:$0xff] %v1836
        %1891 = vst [vmem:[%s193 + $0xd8] sm:$0xff] %v1841
        %1892 = vst [vmem:[%s193 + $0xe0] sm:$0xff] %v1846
        %1893 = vst [vmem:[%s193 + $0xe8] sm:$0xff] %v1851
        %1894 = vst [vmem:[%s193 + $0xf0] sm:$0xff] %v1856
        %1895 = vst [vmem:[%s193 + $0xf8] sm:$0xff] %v1861
        %v1896 = vadd.f32 %v1706, %v1711
        %v1897 = vadd.f32 %v1896, %v1716
        %v1898 = vadd.f32 %v1897, %v1721
        %v1899 = vadd.f32 %v1898, %v1726
        %v1900 = vadd.f32 %v1899, %v1731
        %v1901 = vadd.f32 %v1900, %v1736
        %v1902 = vadd.f32 %v1901, %v1741
        %v1903 = vadd.f32 %v1902, %v1746
        %v1904 = vadd.f32 %v1903, %v1751
        %v1905 = vadd.f32 %v1904, %v1756
        %v1906 = vadd.f32 %v1905, %v1761
        %v1907 = vadd.f32 %v1906, %v1766
        %v1908 = vadd.f32 %v1907, %v1771
        %v1909 = vadd.f32 %v1908, %v1776
        %v1910 = vadd.f32 %v1909, %v1781
        %v1911 = vadd.f32 %v1910, %v1786
        %v1912 = vadd.f32 %v1911, %v1791
        %v1913 = vadd.f32 %v1912, %v1796
        %v1914 = vadd.f32 %v1913, %v1801
        %v1915 = vadd.f32 %v1914, %v1806
        %v1916 = vadd.f32 %v1915, %v1811
        %v1917 = vadd.f32 %v1916, %v1816
        %v1918 = vadd.f32 %v1917, %v1821
        %v1919 = vadd.f32 %v1918, %v1826
        %v1920 = vadd.f32 %v1919, %v1831
        %v1921 = vadd.f32 %v1920, %v1836
        %v1922 = vadd.f32 %v1921, %v1841
        %v1923 = vadd.f32 %v1922, %v1846
        %v1924 = vadd.f32 %v1923, %v1851
        %v1925 = vadd.f32 %v1924, %v1856
        %v1926 = vadd.f32 %v1925, %v1861
        %v1927 = vrot.slane %v1926, 4
        %v1928 = vadd.f32 %v1926, %v1927
        %v1929 = vrot.slane %v1928, 2
        %v1930 = vadd.f32 %v1928, %v1929
        %v1931 = vrot.slane %v1930, 1
        %v1932 = vadd.f32 %v1930, %v1931
        %v1933 = vrcp.pop 256.0
        %v1934 = vmul.f32 %v1932, %v1933
        %v1935 = vsub.f32 %v1706, %v1934
        %v1936 = vsub.f32 %v1711, %v1934
        %v1937 = vsub.f32 %v1716, %v1934
        %v1938 = vsub.f32 %v1721, %v1934
        %v1939 = vsub.f32 %v1726, %v1934
        %v1940 = vsub.f32 %v1731, %v1934
        %v1941 = vsub.f32 %v1736, %v1934
        %v1942 = vsub.f32 %v1741, %v1934
        %v1943 = vsub.f32 %v1746, %v1934
        %v1944 = vsub.f32 %v1751, %v1934
        %v1945 = vsub.f32 %v1756, %v1934
        %v1946 = vsub.f32 %v1761, %v1934
        %v1947 = vsub.f32 %v1766, %v1934
        %v1948 = vsub.f32 %v1771, %v1934
        %v1949 = vsub.f32 %v1776, %v1934
        %v1950 = vsub.f32 %v1781, %v1934
        %v1951 = vsub.f32 %v1786, %v1934
        %v1952 = vsub.f32 %v1791, %v1934
        %v1953 = vsub.f32 %v1796, %v1934
        %v1954 = vsub.f32 %v1801, %v1934
        %v1955 = vsub.f32 %v1806, %v1934
        %v1956 = vsub.f32 %v1811, %v1934
        %v1957 = vsub.f32 %v1816, %v1934
        %v1958 = vsub.f32 %v1821, %v1934
        %v1959 = vsub.f32 %v1826, %v1934
        %v1960 = vsub.f32 %v1831, %v1934
        %v1961 = vsub.f32 %v1836, %v1934
        %v1962 = vsub.f32 %v1841, %v1934
        %v1963 = vsub.f32 %v1846, %v1934
        %v1964 = vsub.f32 %v1851, %v1934
        %v1965 = vsub.f32 %v1856, %v1934
        %v1966 = vsub.f32 %v1861, %v1934
        %v1967 = vmul.f32 %v1935, %v1935
        %v1968 = vmul.f32 %v1936, %v1936
        %v1969 = vmul.f32 %v1937, %v1937
        %v1970 = vmul.f32 %v1938, %v1938
        %v1971 = vmul.f32 %v1939, %v1939
        %v1972 = vmul.f32 %v1940, %v1940
        %v1973 = vmul.f32 %v1941, %v1941
        %v1974 = vmul.f32 %v1942, %v1942
        %v1975 = vmul.f32 %v1943, %v1943
        %v1976 = vmul.f32 %v1944, %v1944
        %v1977 = vmul.f32 %v1945, %v1945
        %v1978 = vmul.f32 %v1946, %v1946
        %v1979 = vmul.f32 %v1947, %v1947
        %v1980 = vmul.f32 %v1948, %v1948
        %v1981 = vmul.f32 %v1949, %v1949
        %v1982 = vmul.f32 %v1950, %v1950
        %v1983 = vmul.f32 %v1951, %v1951
        %v1984 = vmul.f32 %v1952, %v1952
        %v1985 = vmul.f32 %v1953, %v1953
        %v1986 = vmul.f32 %v1954, %v1954
        %v1987 = vmul.f32 %v1955, %v1955
        %v1988 = vmul.f32 %v1956, %v1956
        %v1989 = vmul.f32 %v1957, %v1957
        %v1990 = vmul.f32 %v1958, %v1958
        %v1991 = vmul.f32 %v1959, %v1959
        %v1992 = vmul.f32 %v1960, %v1960
        %v1993 = vmul.f32 %v1961, %v1961
        %v1994 = vmul.f32 %v1962, %v1962
        %v1995 = vmul.f32 %v1963, %v1963
        %v1996 = vmul.f32 %v1964, %v1964
        %v1997 = vmul.f32 %v1965, %v1965
        %v1998 = vmul.f32 %v1966, %v1966
        %v1999 = vadd.f32 %v1967, %v1968
        %v2000 = vadd.f32 %v1999, %v1969
        %v2001 = vadd.f32 %v2000, %v1970
        %v2002 = vadd.f32 %v2001, %v1971
        %v2003 = vadd.f32 %v2002, %v1972
        %v2004 = vadd.f32 %v2003, %v1973
        %v2005 = vadd.f32 %v2004, %v1974
        %v2006 = vadd.f32 %v2005, %v1975
        %v2007 = vadd.f32 %v2006, %v1976
        %v2008 = vadd.f32 %v2007, %v1977
        %v2009 = vadd.f32 %v2008, %v1978
        %v2010 = vadd.f32 %v2009, %v1979
        %v2011 = vadd.f32 %v2010, %v1980
        %v2012 = vadd.f32 %v2011, %v1981
        %v2013 = vadd.f32 %v2012, %v1982
        %v2014 = vadd.f32 %v2013, %v1983
        %v2015 = vadd.f32 %v2014, %v1984
        %v2016 = vadd.f32 %v2015, %v1985
        %v2017 = vadd.f32 %v2016, %v1986
        %v2018 = vadd.f32 %v2017, %v1987
        %v2019 = vadd.f32 %v2018, %v1988
        %v2020 = vadd.f32 %v2019, %v1989
        %v2021 = vadd.f32 %v2020, %v1990
        %v2022 = vadd.f32 %v2021, %v1991
        %v2023 = vadd.f32 %v2022, %v1992
        %v2024 = vadd.f32 %v2023, %v1993
        %v2025 = vadd.f32 %v2024, %v1994
        %v2026 = vadd.f32 %v2025, %v1995
        %v2027 = vadd.f32 %v2026, %v1996
        %v2028 = vadd.f32 %v2027, %v1997
        %v2029 = vadd.f32 %v2028, %v1998
        %v2030 = vrot.slane %v2029, 4
        %v2031 = vadd.f32 %v2029, %v2030
        %v2032 = vrot.slane %v2031, 2
        %v2033 = vadd.f32 %v2031, %v2032
        %v2034 = vrot.slane %v2033, 1
        %v2035 = vadd.f32 %v2033, %v2034
        %vm2036 = vcmask 1040384
        %v2037 = vsel %vm2036, %v1932, %v2035
        %vm2038 = vcmask 1041408
        %v2039 = vsel %vm2038, %v2037, 0.0
        %2040 = vst [vmem:[%s200] sm:$0xff] %v2039
        %s2041 = sand.u32 %s92, 1
        %s2042 = scalar_lea.sflag [#allocation3], %s2041
        %s2043 = sand.u32 %s92, 1
        %s2044 = smul.addr %s2043, 256
        %s2045 = scalar_lea.vmem [#allocation2], %s2044
        %s2046 = sand.u32 %s120, 1
        %s2047 = scalar_lea.sflag [#allocation5], %s2046
        %s2048 = sand.u32 %s120, 1
        %s2049 = smul.addr %s2048, 8
        %s2050 = scalar_lea.vmem [#allocation4], %s2049
        // Predicated region
        $region29: #{tpu_custom_call.1} parent=27 // pred_check
          %p2051 = pneg %p102
        $region30: #{tpu_custom_call.1} parent=27 // pred_check_branch
          %2053 = sbr.rel (%p2051) target = $region32
        $region31: #{tpu_custom_call.1} parent=27 // pred_region
          %s2054 = smul.u32 32, %s26
          %s2056 = ssub.s32 4096, 4096
          %2057 = vsyncadd %s2042, %s2056
          %s2058 = smul.addr %s25, 32
          %s2059 = sadd.s32 %s2054, %s2058
          %s2060 = smul.addr %s2059, 128
          %s2061 = scalar_lea.hbm %s2, %s2060
          %s2062 = sshll.u32 %s2045, 4
          %s2063 = int_to_ptr.vmem [resolvable:$true] %s2062
          %2068 = dma.vmem_to_hbm [thread:$0]  %s2063, 4096, %s2061, %s2042, 128, 128, 8
        $region32: #{tpu_custom_call.1} parent=27 // pred_fallthru
          _
        // Predicated region
        $region33: #{tpu_custom_call.1} parent=27 // pred_check
          %p2069 = pneg %p130
        $region34: #{tpu_custom_call.1} parent=27 // pred_check_branch
          %2071 = sbr.rel (%p2069) target = $region36
        $region35: #{tpu_custom_call.1} parent=27 // pred_region
          %s2073 = ssub.s32 128, 128
          %2074 = vsyncadd %s2047, %s2073
          %s2075 = sadd.s32 %s26, %s25
          %s2076 = smul.addr %s2075, 128
          %s2077 = scalar_lea.hbm %s3, %s2076
          %s2079 = sshll.u32 %s2050, 4
          %s2080 = int_to_ptr.vmem [resolvable:$true] %s2079
          %2082 = dma.vmem_to_hbm [thread:$0]  %s2080, 128, %s2077, %s2047
        $region36: #{tpu_custom_call.1} parent=27 // pred_fallthru
          _
      $region28: #{tpu_custom_call.1} parent=5 // pred_fallthru
        _
      %p2083 = scmp.le.s32.totalorder 2, %s16
      // Predicated region
      $region37: #{tpu_custom_call.1} parent=5 // pred_check
        %p2084 = pneg %p2083
      $region38: #{tpu_custom_call.1} parent=5 // pred_check_branch
        %2086 = sbr.rel (%p2084) target = $region40
      $region39: #{tpu_custom_call.1} parent=5 // pred_region
        %s2087 = ssub.s32 %s16, 2
        // Predicated region
        $region41: #{tpu_custom_call.1} parent=39 // pred_check
          %p2088 = pneg %p108
        $region42: #{tpu_custom_call.1} parent=39 // pred_check_branch
          %2090 = sbr.rel (%p2088) target = $region44
        $region43: #{tpu_custom_call.1} parent=39 // pred_region
          %s2091 = sand.u32 %s93, 1
          %s2092 = scalar_lea.sflag [#allocation3], %s2091
          %s2093 = sand.u32 %s93, 1
          %s2094 = smul.addr %s2093, 256
          %s2095 = scalar_lea.vmem [#allocation2], %s2094
          %2096 = dma.done %s2092, 4096
        $region44: #{tpu_custom_call.1} parent=39 // pred_fallthru
          _
        // Predicated region
        $region45: #{tpu_custom_call.1} parent=39 // pred_check
          %p2097 = pneg %p136
        $region46: #{tpu_custom_call.1} parent=39 // pred_check_branch
          %2099 = sbr.rel (%p2097) target = $region48
        $region47: #{tpu_custom_call.1} parent=39 // pred_region
          %s2100 = sand.u32 %s121, 1
          %s2101 = scalar_lea.sflag [#allocation5], %s2100
          %s2102 = sand.u32 %s121, 1
          %s2103 = smul.addr %s2102, 8
          %s2104 = scalar_lea.vmem [#allocation4], %s2103
          %2105 = dma.done %s2101, 128
        $region48: #{tpu_custom_call.1} parent=39 // pred_fallthru
          _
      $region40: #{tpu_custom_call.1} parent=5 // pred_fallthru
        _
    $region6: #{tpu_custom_call.1} parent=1 // loop_footer
      %s20 = sadd.s32 1, %s16
    $region7: #{tpu_custom_call.1} parent=1 // loop_footer_branch
      %15 = sbr.rel target = $region3
    $region8: #{tpu_custom_call.1} parent=1 // loop_exit
      _
    %2106 = vsyncpa [#allocation3], 1
    %s2107 = scalar_lea.sflag [#allocation3], 1
    %2108 = vsyncpa %s2107, 1
    %2109 = vsyncpa [#allocation5], 1
    %s2110 = scalar_lea.sflag [#allocation5], 1
    %2111 = vsyncpa %s2110, 1

</llo_original>
